<compile_context>
chip_gen: v5e
topology: v5e:2x2
jax: 0.10.0
libtpu: 0.0.40
codegen_flags: <defaults>
</compile_context>

<pallas_src>
import functools

import jax
import jax.numpy as jnp
import numpy as np
from jax.experimental import pallas as pl
from jax.experimental.pallas import tpu as pltpu

# ---------------------------------------------------------------------------
# Synthetic Darknet config (equivalent of parse_model_config on a tiny cfg).
# ---------------------------------------------------------------------------
ANCHORS_STR = "10,14, 23,27, 37,58, 81,82, 135,169, 344,319"

MODULE_DEFS = [
    {"type": "convolutional", "batch_normalize": "1", "filters": "8",
     "size": "3", "stride": "1", "activation": "leaky"},                      # 0
    {"type": "convolutional", "batch_normalize": "1", "filters": "16",
     "size": "3", "stride": "2", "activation": "leaky"},                      # 1
    {"type": "convolutional", "batch_normalize": "1", "filters": "16",
     "size": "1", "stride": "1", "activation": "mish"},                       # 2
    {"type": "shortcut", "from": "-2", "activation": "linear"},               # 3
    {"type": "maxpool", "size": "2", "stride": "2"},                          # 4
    {"type": "convolutional", "batch_normalize": "0", "filters": "21",
     "size": "1", "stride": "1", "activation": "linear"},                     # 5
    {"type": "yolo", "mask": "3,4,5", "anchors": ANCHORS_STR, "classes": "2"},# 6
    {"type": "route", "layers": "-3"},                                        # 7
    {"type": "upsample", "stride": "2"},                                      # 8
    {"type": "route", "layers": "-1,1"},                                      # 9
    {"type": "convolutional", "batch_normalize": "0", "filters": "21",
     "size": "1", "stride": "1", "activation": "linear"},                     # 10
    {"type": "yolo", "mask": "0,1,2", "anchors": ANCHORS_STR, "classes": "2"},# 11
]

IN_CHANNELS = 4

_VMEM = pl.BlockSpec(memory_space=pltpu.MemorySpace.VMEM)


# ---------------------------------------------------------------------------
# Parameter initialization (deterministic; BN in eval mode -> scale/shift)
# ---------------------------------------------------------------------------
def init_params(key, in_channels):
    params = {}
    channels = [in_channels]
    for i, mdef in enumerate(MODULE_DEFS):
        t = mdef["type"]
        filters = channels[-1]
        if t == "convolutional":
            bn = int(mdef["batch_normalize"])
            cout = int(mdef["filters"])
            k = int(mdef["size"])
            cin = channels[-1]
            kk = jax.random.fold_in(key, i)
            k1, k2, k3, k4, k5 = jax.random.split(kk, 5)
            w = jax.random.normal(k1, (cout, cin, k, k), jnp.float32) * 0.1
            if bn:
                gamma = jax.random.uniform(k2, (cout,), jnp.float32, 0.5, 1.5)
                beta = jax.random.normal(k3, (cout,), jnp.float32) * 0.1
                rmean = jax.random.normal(k4, (cout,), jnp.float32) * 0.1
                rvar = jax.random.uniform(k5, (cout,), jnp.float32, 0.5, 1.5)
                scale = gamma / jnp.sqrt(rvar + 1e-5)
                shift = beta - rmean * scale
            else:
                bias = jax.random.normal(k2, (cout,), jnp.float32) * 0.1
                scale = jnp.ones((cout,), jnp.float32)
                shift = bias
            params[i] = {"w": w, "scale": scale, "shift": shift}
            filters = cout
        elif t == "route":
            layers = [int(v) for v in mdef["layers"].split(",")]
            filters = sum(channels[1:][l] for l in layers) // int(mdef.get("groups", 1))
        elif t == "shortcut":
            filters = channels[1:][int(mdef["from"])]
        channels.append(filters)
    return params


# ---------------------------------------------------------------------------
# Host-side constant builders (slab layout: rows = n*H + h, cols = w*C + c)
# ---------------------------------------------------------------------------
def _conv_slab_consts(w, scale, shift, n, h, w_sp, c_slab, stride):
    """k x k conv on the slab as  y = sum_di R[di] @ x @ M[di] + b  (BN folded)."""
    w = np.asarray(w, np.float32) * np.asarray(scale, np.float32)[:, None, None, None]
    shift = np.asarray(shift, np.float32)
    cout, cin, k, _ = w.shape
    pad = (k - 1) // 2
    ho = (h + 2 * pad - k) // stride + 1
    wo = (w_sp + 2 * pad - k) // stride + 1
    r_mat = np.zeros((k, n * ho, n * h), np.float32)
    m_mat = np.zeros((k, w_sp * c_slab, wo * cout), np.float32)
    for di in range(k):
        for b in range(n):
            for oh in range(ho):
                hs = stride * oh + di - pad
                if 0 <= hs < h:
                    r_mat[di, b * ho + oh, b * h + hs] = 1.0
        for dj in range(k):
            for ow in range(wo):
                ws = stride * ow + dj - pad
                if 0 <= ws < w_sp:
                    m_mat[di, ws * c_slab:ws * c_slab + cin,
                          ow * cout:(ow + 1) * cout] = w[:, :, di, dj].T
    b_row = np.tile(shift, wo)[None, :]
    return (jnp.asarray(r_mat), jnp.asarray(m_mat), jnp.asarray(b_row),
            ho, wo, cout)


def _pointwise_slab_consts(w2d, shift, w_sp, c_in_slab):
    """1x1/s1 conv as a block-diagonal matrix on the slab layout."""
    w2d = np.asarray(w2d, np.float32)           # (cout, cin), scale already folded
    shift = np.asarray(shift, np.float32)
    cout, cin = w2d.shape
    blk = np.zeros((w_sp * c_in_slab, w_sp * cout), np.float32)
    for ow in range(w_sp):
        blk[ow * c_in_slab:ow * c_in_slab + cin, ow * cout:(ow + 1) * cout] = w2d.T
    b_row = np.tile(shift, w_sp)[None, :]
    return jnp.asarray(blk), jnp.asarray(b_row)


def _maxpool_consts(n, h, w_sp, c):
    ho, wo = h // 2, w_sp // 2
    r_mat = np.zeros((2, n * ho, n * h), np.float32)
    c_mat = np.zeros((2, w_sp * c, wo * c), np.float32)
    for off in range(2):
        for b in range(n):
            for oh in range(ho):
                r_mat[off, b * ho + oh, b * h + 2 * oh + off] = 1.0
        for ow in range(wo):
            for ch in range(c):
                c_mat[off, (2 * ow + off) * c + ch, ow * c + ch] = 1.0
    return jnp.asarray(r_mat), jnp.asarray(c_mat), ho, wo


def _upsample_consts(n, h, w_sp, c, scale):
    ho, wo = h * scale, w_sp * scale
    r_mat = np.zeros((n * ho, n * h), np.float32)
    c_mat = np.zeros((w_sp * c, wo * c), np.float32)
    for b in range(n):
        for oh in range(ho):
            r_mat[b * ho + oh, b * h + oh // scale] = 1.0
    for ow in range(wo):
        for ch in range(c):
            c_mat[(ow // scale) * c + ch, ow * c + ch] = 1.0
    return jnp.asarray(r_mat), jnp.asarray(c_mat), ho, wo


def _yolo_consts(mdef, n, ny, nx, img_size):
    anchor_idxs = [int(v) for v in mdef["mask"].split(",")]
    flat = [int(v) for v in mdef["anchors"].split(",")]
    anchors = [(flat[i], flat[i + 1]) for i in range(0, len(flat), 2)]
    anchors = [anchors[i] for i in anchor_idxs]
    num_classes = int(mdef["classes"])
    no = num_classes + 5
    na = len(anchors)
    stride = img_size // ny
    c = na * no
    rows, cols = n * ny, nx * c
    g = np.zeros((rows, cols), np.float32)        # grid * stride (xy cols only)
    a = np.ones((rows, cols), np.float32)         # anchor wh (wh cols only)
    sel = np.full((rows, cols), 2.0, np.float32)  # 0: xy, 1: wh, 2: sigmoid
    for b in range(n):
        for y in range(ny):
            r = b * ny + y
            for x in range(nx):
                for ai in range(na):
                    q0 = x * c + ai * no
                    g[r, q0 + 0] = x * stride
                    g[r, q0 + 1] = y * stride
                    sel[r, q0 + 0] = 0.0
                    sel[r, q0 + 1] = 0.0
                    sel[r, q0 + 2] = 1.0
                    sel[r, q0 + 3] = 1.0
                    a[r, q0 + 2] = anchors[ai][0]
                    a[r, q0 + 3] = anchors[ai][1]
    return (jnp.asarray(g), jnp.asarray(a), jnp.asarray(sel),
            float(stride), na, no)


# ---------------------------------------------------------------------------
# The fused Pallas kernel
# ---------------------------------------------------------------------------
def _yolo_transform(v, g, a, sel, stride):
    sig = jax.nn.sigmoid(v)
    xy = sig * stride + g                 # (sigmoid + grid) * stride
    wh = jnp.exp(v) * a                   # exp * anchor_grid
    return jnp.where(sel < 0.5, xy, jnp.where(sel < 1.5, wh, sig))


def _darknet_fused_kernel(
        x_ref,
        r0_ref, m0_ref, b0_ref,
        r1_ref, m1_ref, b1_ref,
        w2_ref, b2_ref,
        rmp_ref, cmp_ref,
        w5_ref, b5_ref,
        g1_ref, a1_ref, s1_ref,
        ru_ref, cu_ref,
        w10_ref, b10_ref,
        g2_ref, a2_ref, s2_ref,
        det1_ref, det2_ref,
        *, stride1, stride2):
    dotf = functools.partial(jnp.dot, preferred_element_type=jnp.float32)

    def leaky(v):
        return jnp.where(v > 0, v, 0.1 * v)

    def mish(v):
        return v * jnp.tanh(jnp.logaddexp(v, 0.0))   # x * tanh(softplus(x))

    def conv3(x, r_ref, m_ref, b_ref):
        acc = dotf(r_ref[0], dotf(x, m_ref[0]))
        for di in range(1, r_ref.shape[0]):
            acc = acc + dotf(r_ref[di], dotf(x, m_ref[di]))
        return acc + b_ref[...]

    x = x_ref[...]
    # layer 0: conv 3x3/1 + BN + leaky            -> (N*16, 16*8)
    y0 = leaky(conv3(x, r0_ref, m0_ref, b0_ref))
    # layer 1: conv 3x3/2 + BN + leaky            -> (N*8, 8*16)
    y1 = leaky(conv3(y0, r1_ref, m1_ref, b1_ref))
    # layer 2: conv 1x1 + BN + mish, layer 3 shortcut (+ y1) fused in
    y3 = mish(dotf(y1, w2_ref[...]) + b2_ref[...]) + y1
    # layer 4: maxpool 2x2/2                      -> (N*4, 4*16)
    top = dotf(rmp_ref[0], y3)
    bot = dotf(rmp_ref[1], y3)
    y4 = jnp.maximum(
        jnp.maximum(dotf(top, cmp_ref[0]), dotf(top, cmp_ref[1])),
        jnp.maximum(dotf(bot, cmp_ref[0]), dotf(bot, cmp_ref[1])))
    # layer 5: conv 1x1 (bias, linear)            -> (N*4, 4*21)
    y5 = dotf(y4, w5_ref[...]) + b5_ref[...]
    # layer 6: yolo head 1
    det1_ref[...] = _yolo_transform(y5, g1_ref[...], a1_ref[...], s1_ref[...],
                                    stride1)
    # layer 7: route(-3) -> y4 ; layer 8: nearest upsample x2 -> (N*8, 8*16)
    y8 = dotf(dotf(ru_ref[...], y4), cu_ref[...])
    # layer 9: route(-1,1) concat handled by split weights; layer 10: conv 1x1
    y10 = dotf(y8, w10_ref[0]) + dotf(y1, w10_ref[1]) + b10_ref[...]
    # layer 11: yolo head 2
    det2_ref[...] = _yolo_transform(y10, g2_ref[...], a2_ref[...], s2_ref[...],
                                    stride2)


# ---------------------------------------------------------------------------
# Builder: folds BN, builds the constant matrices, returns a jitted forward.
# The fused kernel is specialized to this module graph.
# ---------------------------------------------------------------------------
def build_darknet_forward(params, input_shape):
    n, cin, h, w_sp = input_shape
    img_size = h
    cin_pad = 8                       # pad input channels 4 -> 8 (alignment)
    defs = {i: d for i, d in enumerate(MODULE_DEFS)}

    # layer 0: conv 3x3/1 (4 -> 8)
    p0 = params[0]
    r0, m0, b0, h0, w0, c0 = _conv_slab_consts(
        p0["w"], p0["scale"], p0["shift"], n, h, w_sp, cin_pad,
        int(defs[0]["stride"]))
    # layer 1: conv 3x3/2 (8 -> 16)
    p1 = params[1]
    r1, m1, b1, h1, w1, c1 = _conv_slab_consts(
        p1["w"], p1["scale"], p1["shift"], n, h0, w0, c0,
        int(defs[1]["stride"]))
    # layer 2: conv 1x1 (16 -> 16), mish; layer 3 shortcut fused in the kernel
    p2 = params[2]
    w2 = (np.asarray(p2["w"], np.float32)[:, :, 0, 0]
          * np.asarray(p2["scale"], np.float32)[:, None])
    w2_blk, b2 = _pointwise_slab_consts(w2, p2["shift"], w1, c1)
    # layer 4: maxpool 2x2/2
    rmp, cmp_, h4, w4 = _maxpool_consts(n, h1, w1, c1)
    # layer 5: conv 1x1 (16 -> 21), bias, linear
    p5 = params[5]
    w5 = (np.asarray(p5["w"], np.float32)[:, :, 0, 0]
          * np.asarray(p5["scale"], np.float32)[:, None])
    w5_blk, b5 = _pointwise_slab_consts(w5, p5["shift"], w4, c1)
    c5 = w5.shape[0]
    # layer 6: yolo head 1
    g1, a1, s1, stride1, na1, no1 = _yolo_consts(defs[6], n, h4, w4, img_size)
    assert c5 == na1 * no1
    # layers 7+8: route(-3) -> maxpool output, nearest upsample x2
    ru, cu, h8, w8 = _upsample_consts(n, h4, w4, c1, int(defs[8]["stride"]))
    # layers 9+10: route(-1,1)=concat(y8, y1) folded into split 1x1 weights
    p10 = params[10]
    w10 = (np.asarray(p10["w"], np.float32)[:, :, 0, 0]
           * np.asarray(p10["scale"], np.float32)[:, None])
    w10a_blk, b10 = _pointwise_slab_consts(w10[:, :c1], p10["shift"], w8, c1)
    w10b_blk, _ = _pointwise_slab_consts(w10[:, c1:], p10["shift"], w8, c1)
    w10_blk = jnp.stack([w10a_blk, w10b_blk])
    c10 = w10.shape[0]
    # layer 11: yolo head 2
    g2, a2, s2, stride2, na2, no2 = _yolo_consts(defs[11], n, h8, w8, img_size)
    assert c10 == na2 * no2

    consts = (r0, m0, b0, r1, m1, b1, w2_blk, b2, rmp, cmp_, w5_blk, b5,
              g1, a1, s1, ru, cu, w10_blk, b10, g2, a2, s2)

    det1_shape = (n * h4, w4 * c5)
    det2_shape = (n * h8, w8 * c10)

    fused = pl.pallas_call(
        functools.partial(_darknet_fused_kernel,
                          stride1=stride1, stride2=stride2),
        out_shape=(jax.ShapeDtypeStruct(det1_shape, jnp.float32),
                   jax.ShapeDtypeStruct(det2_shape, jnp.float32)),
        in_specs=[_VMEM] * (1 + len(consts)),
        out_specs=(_VMEM, _VMEM),
    )

    def forward(x_nchw):
        # NCHW -> NHWC -> pad channels -> lane-dense slab (N*H, W*C).
        x_nhwc = jnp.transpose(x_nchw, (0, 2, 3, 1)).astype(jnp.float32)
        x_nhwc = jnp.pad(x_nhwc, ((0, 0), (0, 0), (0, 0), (0, cin_pad - cin)))
        x_slab = x_nhwc.reshape(n * h, w_sp * cin_pad)

        det1_slab, det2_slab = fused(x_slab, *consts)

        def to_dets(det_slab, ny, nx, na, no):
            d = det_slab.reshape(n, ny, nx, na, no)
            d = jnp.transpose(d, (0, 3, 1, 2, 4))        # (bs, na, ny, nx, no)
            return d.reshape(n, na * ny * nx, no)

        det1 = to_dets(det1_slab, h4, w4, na1, no1)
        det2 = to_dets(det2_slab, h8, w8, na2, no2)
        # TODO(synk): the PyTorch source does torch.cat over (x, x_atk) tuples in
        # eval mode (which would error); we concatenate the detection tensors.
        return jnp.concatenate([det1, det2], axis=1)

    return jax.jit(forward)


if __name__ == "__main__":
    key = jax.random.PRNGKey(0)
    x = jax.random.normal(jax.random.fold_in(key, 999),
                          (2, IN_CHANNELS, 16, 16), jnp.float32)
    params = init_params(key, IN_CHANNELS)
    forward = build_darknet_forward(params, (2, IN_CHANNELS, 16, 16))
    out = jax.block_until_ready(forward(x))
    assert out.shape == (2, 3 * 4 * 4 + 3 * 8 * 8, 7), out.shape
    assert bool(jnp.all(jnp.isfinite(out)))
    print("KERNEL_OK")
</pallas_src>

<mosaic_0001>
module attributes {stable_mosaic.version = 11 : i64} {
  func.func @_darknet_fused_kernel(%arg0: memref<32x128xf32, #tpu.memory_space<vmem>>, %arg1: memref<3x32x32xf32, #tpu.memory_space<vmem>>, %arg2: memref<3x128x128xf32, #tpu.memory_space<vmem>>, %arg3: memref<1x128xf32, #tpu.memory_space<vmem>>, %arg4: memref<3x16x32xf32, #tpu.memory_space<vmem>>, %arg5: memref<3x128x128xf32, #tpu.memory_space<vmem>>, %arg6: memref<1x128xf32, #tpu.memory_space<vmem>>, %arg7: memref<128x128xf32, #tpu.memory_space<vmem>>, %arg8: memref<1x128xf32, #tpu.memory_space<vmem>>, %arg9: memref<2x8x16xf32, #tpu.memory_space<vmem>>, %arg10: memref<2x128x64xf32, #tpu.memory_space<vmem>>, %arg11: memref<64x84xf32, #tpu.memory_space<vmem>>, %arg12: memref<1x84xf32, #tpu.memory_space<vmem>>, %arg13: memref<8x84xf32, #tpu.memory_space<vmem>>, %arg14: memref<8x84xf32, #tpu.memory_space<vmem>>, %arg15: memref<8x84xf32, #tpu.memory_space<vmem>>, %arg16: memref<16x8xf32, #tpu.memory_space<vmem>>, %arg17: memref<64x128xf32, #tpu.memory_space<vmem>>, %arg18: memref<2x128x168xf32, #tpu.memory_space<vmem>>, %arg19: memref<1x168xf32, #tpu.memory_space<vmem>>, %arg20: memref<16x168xf32, #tpu.memory_space<vmem>>, %arg21: memref<16x168xf32, #tpu.memory_space<vmem>>, %arg22: memref<16x168xf32, #tpu.memory_space<vmem>>, %arg23: memref<8x84xf32, #tpu.memory_space<vmem>>, %arg24: memref<16x168xf32, #tpu.memory_space<vmem>>) attributes {dimension_semantics = [], scalar_prefetch = 0 : i64, scratch_operands = 0 : i64, tpu.core_type = #tpu.core_type<tc>} {
    %c0 = arith.constant 0 : index
    %c0_0 = arith.constant 0 : index
    %0 = vector.load %arg0[%c0, %c0_0] : memref<32x128xf32, #tpu.memory_space<vmem>>, vector<32x128xf32>
    %c0_1 = arith.constant 0 : index
    %c0_2 = arith.constant 0 : index
    %c0_3 = arith.constant 0 : index
    %1 = vector.load %arg1[%c0_1, %c0_2, %c0_3] : memref<3x32x32xf32, #tpu.memory_space<vmem>>, vector<1x32x32xf32>
    %2 = vector.shape_cast %1 : vector<1x32x32xf32> to vector<32x32xf32>
    %c0_4 = arith.constant 0 : index
    %c0_5 = arith.constant 0 : index
    %c0_6 = arith.constant 0 : index
    %3 = vector.load %arg2[%c0_4, %c0_5, %c0_6] : memref<3x128x128xf32, #tpu.memory_space<vmem>>, vector<1x128x128xf32>
    %4 = vector.shape_cast %3 : vector<1x128x128xf32> to vector<128x128xf32>
    %cst = arith.constant dense<0.000000e+00> : vector<32x128xf32>
    %5 = tpu.matmul %0, %4, %cst {dimension_numbers = #tpu.dot_dimension_numbers<[1], [0], [0], [1], [0, 0, 1, 1], [], []>} : vector<32x128xf32>, vector<128x128xf32>, vector<32x128xf32> -> vector<32x128xf32>
    %cst_7 = arith.constant dense<0.000000e+00> : vector<32x128xf32>
    %6 = tpu.matmul %2, %5, %cst_7 {dimension_numbers = #tpu.dot_dimension_numbers<[1], [0], [0], [1], [0, 0, 1, 1], [], []>} : vector<32x32xf32>, vector<32x128xf32>, vector<32x128xf32> -> vector<32x128xf32>
    %c1 = arith.constant 1 : index
    %c0_8 = arith.constant 0 : index
    %c0_9 = arith.constant 0 : index
    %7 = vector.load %arg1[%c1, %c0_8, %c0_9] : memref<3x32x32xf32, #tpu.memory_space<vmem>>, vector<1x32x32xf32>
    %8 = vector.shape_cast %7 : vector<1x32x32xf32> to vector<32x32xf32>
    %c1_10 = arith.constant 1 : index
    %c0_11 = arith.constant 0 : index
    %c0_12 = arith.constant 0 : index
    %9 = vector.load %arg2[%c1_10, %c0_11, %c0_12] : memref<3x128x128xf32, #tpu.memory_space<vmem>>, vector<1x128x128xf32>
    %10 = vector.shape_cast %9 : vector<1x128x128xf32> to vector<128x128xf32>
    %cst_13 = arith.constant dense<0.000000e+00> : vector<32x128xf32>
    %11 = tpu.matmul %0, %10, %cst_13 {dimension_numbers = #tpu.dot_dimension_numbers<[1], [0], [0], [1], [0, 0, 1, 1], [], []>} : vector<32x128xf32>, vector<128x128xf32>, vector<32x128xf32> -> vector<32x128xf32>
    %cst_14 = arith.constant dense<0.000000e+00> : vector<32x128xf32>
    %12 = tpu.matmul %8, %11, %cst_14 {dimension_numbers = #tpu.dot_dimension_numbers<[1], [0], [0], [1], [0, 0, 1, 1], [], []>} : vector<32x32xf32>, vector<32x128xf32>, vector<32x128xf32> -> vector<32x128xf32>
    %13 = arith.addf %6, %12 : vector<32x128xf32>
    %c2 = arith.constant 2 : index
    %c0_15 = arith.constant 0 : index
    %c0_16 = arith.constant 0 : index
    %14 = vector.load %arg1[%c2, %c0_15, %c0_16] : memref<3x32x32xf32, #tpu.memory_space<vmem>>, vector<1x32x32xf32>
    %15 = vector.shape_cast %14 : vector<1x32x32xf32> to vector<32x32xf32>
    %c2_17 = arith.constant 2 : index
    %c0_18 = arith.constant 0 : index
    %c0_19 = arith.constant 0 : index
    %16 = vector.load %arg2[%c2_17, %c0_18, %c0_19] : memref<3x128x128xf32, #tpu.memory_space<vmem>>, vector<1x128x128xf32>
    %17 = vector.shape_cast %16 : vector<1x128x128xf32> to vector<128x128xf32>
    %cst_20 = arith.constant dense<0.000000e+00> : vector<32x128xf32>
    %18 = tpu.matmul %0, %17, %cst_20 {dimension_numbers = #tpu.dot_dimension_numbers<[1], [0], [0], [1], [0, 0, 1, 1], [], []>} : vector<32x128xf32>, vector<128x128xf32>, vector<32x128xf32> -> vector<32x128xf32>
    %cst_21 = arith.constant dense<0.000000e+00> : vector<32x128xf32>
    %19 = tpu.matmul %15, %18, %cst_21 {dimension_numbers = #tpu.dot_dimension_numbers<[1], [0], [0], [1], [0, 0, 1, 1], [], []>} : vector<32x32xf32>, vector<32x128xf32>, vector<32x128xf32> -> vector<32x128xf32>
    %20 = arith.addf %13, %19 : vector<32x128xf32>
    %c0_22 = arith.constant 0 : index
    %c0_23 = arith.constant 0 : index
    %21 = vector.load %arg3[%c0_22, %c0_23] : memref<1x128xf32, #tpu.memory_space<vmem>>, vector<1x128xf32>
    %22 = vector.broadcast %21 : vector<1x128xf32> to vector<32x128xf32>
    %23 = arith.addf %20, %22 : vector<32x128xf32>
    %cst_24 = arith.constant 0.000000e+00 : f32
    %24 = vector.broadcast %cst_24 : f32 to vector<32x128xf32>
    %25 = arith.cmpf ogt, %23, %24 : vector<32x128xf32>
    %cst_25 = arith.constant 1.000000e-01 : f32
    %26 = vector.broadcast %cst_25 : f32 to vector<32x128xf32>
    %27 = arith.mulf %26, %23 : vector<32x128xf32>
    %28 = arith.select %25, %23, %27 : vector<32x128xi1>, vector<32x128xf32>
    %c0_26 = arith.constant 0 : index
    %c0_27 = arith.constant 0 : index
    %c0_28 = arith.constant 0 : index
    %29 = vector.load %arg4[%c0_26, %c0_27, %c0_28] : memref<3x16x32xf32, #tpu.memory_space<vmem>>, vector<1x16x32xf32>
    %30 = vector.shape_cast %29 : vector<1x16x32xf32> to vector<16x32xf32>
    %c0_29 = arith.constant 0 : index
    %c0_30 = arith.constant 0 : index
    %c0_31 = arith.constant 0 : index
    %31 = vector.load %arg5[%c0_29, %c0_30, %c0_31] : memref<3x128x128xf32, #tpu.memory_space<vmem>>, vector<1x128x128xf32>
    %32 = vector.shape_cast %31 : vector<1x128x128xf32> to vector<128x128xf32>
    %cst_32 = arith.constant dense<0.000000e+00> : vector<32x128xf32>
    %33 = tpu.matmul %28, %32, %cst_32 {dimension_numbers = #tpu.dot_dimension_numbers<[1], [0], [0], [1], [0, 0, 1, 1], [], []>} : vector<32x128xf32>, vector<128x128xf32>, vector<32x128xf32> -> vector<32x128xf32>
    %cst_33 = arith.constant dense<0.000000e+00> : vector<16x128xf32>
    %34 = tpu.matmul %30, %33, %cst_33 {dimension_numbers = #tpu.dot_dimension_numbers<[1], [0], [0], [1], [0, 0, 1, 1], [], []>} : vector<16x32xf32>, vector<32x128xf32>, vector<16x128xf32> -> vector<16x128xf32>
    %c1_34 = arith.constant 1 : index
    %c0_35 = arith.constant 0 : index
    %c0_36 = arith.constant 0 : index
    %35 = vector.load %arg4[%c1_34, %c0_35, %c0_36] : memref<3x16x32xf32, #tpu.memory_space<vmem>>, vector<1x16x32xf32>
    %36 = vector.shape_cast %35 : vector<1x16x32xf32> to vector<16x32xf32>
    %c1_37 = arith.constant 1 : index
    %c0_38 = arith.constant 0 : index
    %c0_39 = arith.constant 0 : index
    %37 = vector.load %arg5[%c1_37, %c0_38, %c0_39] : memref<3x128x128xf32, #tpu.memory_space<vmem>>, vector<1x128x128xf32>
    %38 = vector.shape_cast %37 : vector<1x128x128xf32> to vector<128x128xf32>
    %cst_40 = arith.constant dense<0.000000e+00> : vector<32x128xf32>
    %39 = tpu.matmul %28, %38, %cst_40 {dimension_numbers = #tpu.dot_dimension_numbers<[1], [0], [0], [1], [0, 0, 1, 1], [], []>} : vector<32x128xf32>, vector<128x128xf32>, vector<32x128xf32> -> vector<32x128xf32>
    %cst_41 = arith.constant dense<0.000000e+00> : vector<16x128xf32>
    %40 = tpu.matmul %36, %39, %cst_41 {dimension_numbers = #tpu.dot_dimension_numbers<[1], [0], [0], [1], [0, 0, 1, 1], [], []>} : vector<16x32xf32>, vector<32x128xf32>, vector<16x128xf32> -> vector<16x128xf32>
    %41 = arith.addf %34, %40 : vector<16x128xf32>
    %c2_42 = arith.constant 2 : index
    %c0_43 = arith.constant 0 : index
    %c0_44 = arith.constant 0 : index
    %42 = vector.load %arg4[%c2_42, %c0_43, %c0_44] : memref<3x16x32xf32, #tpu.memory_space<vmem>>, vector<1x16x32xf32>
    %43 = vector.shape_cast %42 : vector<1x16x32xf32> to vector<16x32xf32>
    %c2_45 = arith.constant 2 : index
    %c0_46 = arith.constant 0 : index
    %c0_47 = arith.constant 0 : index
    %44 = vector.load %arg5[%c2_45, %c0_46, %c0_47] : memref<3x128x128xf32, #tpu.memory_space<vmem>>, vector<1x128x128xf32>
    %45 = vector.shape_cast %44 : vector<1x128x128xf32> to vector<128x128xf32>
    %cst_48 = arith.constant dense<0.000000e+00> : vector<32x128xf32>
    %46 = tpu.matmul %28, %45, %cst_48 {dimension_numbers = #tpu.dot_dimension_numbers<[1], [0], [0], [1], [0, 0, 1, 1], [], []>} : vector<32x128xf32>, vector<128x128xf32>, vector<32x128xf32> -> vector<32x128xf32>
    %cst_49 = arith.constant dense<0.000000e+00> : vector<16x128xf32>
    %47 = tpu.matmul %43, %46, %cst_49 {dimension_numbers = #tpu.dot_dimension_numbers<[1], [0], [0], [1], [0, 0, 1, 1], [], []>} : vector<16x32xf32>, vector<32x128xf32>, vector<16x128xf32> -> vector<16x128xf32>
    %48 = arith.addf %41, %47 : vector<16x128xf32>
    %c0_50 = arith.constant 0 : index
    %c0_51 = arith.constant 0 : index
    %49 = vector.load %arg6[%c0_50, %c0_51] : memref<1x128xf32, #tpu.memory_space<vmem>>, vector<1x128xf32>
    %50 = vector.broadcast %49 : vector<1x128xf32> to vector<16x128xf32>
    %51 = arith.addf %48, %50 : vector<16x128xf32>
    %cst_52 = arith.constant 0.000000e+00 : f32
    %52 = vector.broadcast %cst_52 : f32 to vector<16x128xf32>
    %53 = arith.cmpf ogt, %51, %52 : vector<16x128xf32>
    %cst_53 = arith.constant 1.000000e-01 : f32
    %54 = vector.broadcast %cst_53 : f32 to vector<16x128xf32>
    %55 = arith.mulf %54, %51 : vector<16x128xf32>
    %56 = arith.select %53, %51, %55 : vector<16x128xi1>, vector<16x128xf32>
    %c0_54 = arith.constant 0 : index
    %c0_55 = arith.constant 0 : index
    %57 = vector.load %arg7[%c0_54, %c0_55] : memref<128x128xf32, #tpu.memory_space<vmem>>, vector<128x128xf32>
    %cst_56 = arith.constant dense<0.000000e+00> : vector<16x128xf32>
    %58 = tpu.matmul %56, %57, %cst_56 {dimension_numbers = #tpu.dot_dimension_numbers<[1], [0], [0], [1], [0, 0, 1, 1], [], []>} : vector<16x128xf32>, vector<128x128xf32>, vector<16x128xf32> -> vector<16x128xf32>
    %c0_57 = arith.constant 0 : index
    %c0_58 = arith.constant 0 : index
    %59 = vector.load %arg8[%c0_57, %c0_58] : memref<1x128xf32, #tpu.memory_space<vmem>>, vector<1x128xf32>
    %60 = vector.broadcast %59 : vector<1x128xf32> to vector<16x128xf32>
    %61 = arith.addf %58, %60 : vector<16x128xf32>
    %cst_59 = arith.constant 0.000000e+00 : f32
    %62 = vector.broadcast %cst_59 : f32 to vector<16x128xf32>
    %63 = arith.maximumf %61, %62 : vector<16x128xf32>
    %64 = vector.broadcast %cst_59 : f32 to vector<16x128xf32>
    %65 = arith.subf %61, %64 : vector<16x128xf32>
    %66 = arith.cmpf one, %65, %65 : vector<16x128xf32>
    %67 = vector.broadcast %cst_59 : f32 to vector<16x128xf32>
    %68 = arith.addf %61, %67 : vector<16x128xf32>
    %69 = math.absf %65 : vector<16x128xf32>
    %cst_60 = arith.constant 0.000000e+00 : f32
    %70 = vector.broadcast %cst_60 : f32 to vector<16x128xf32>
    %71 = arith.subf %70, %69 : vector<16x128xf32>
    %72 = math.exp %71 : vector<16x128xf32>
    %73 = math.log1p %72 : vector<16x128xf32>
    %74 = arith.addf %63, %73 : vector<16x128xf32>
    %75 = arith.select %66, %68, %74 : vector<16x128xi1>, vector<16x128xf32>
    %76 = math.tanh %75 : vector<16x128xf32>
    %77 = arith.mulf %61, %76 : vector<16x128xf32>
    %78 = arith.addf %77, %56 : vector<16x128xf32>
    %c0_61 = arith.constant 0 : index
    %c0_62 = arith.constant 0 : index
    %c0_63 = arith.constant 0 : index
    %79 = vector.load %arg9[%c0_61, %c0_62, %c0_63] : memref<2x8x16xf32, #tpu.memory_space<vmem>>, vector<1x8x16xf32>
    %80 = vector.shape_cast %79 : vector<1x8x16xf32> to vector<8x16xf32>
    %cst_64 = arith.constant dense<0.000000e+00> : vector<8x128xf32>
    %81 = tpu.matmul %80, %78, %cst_64 {dimension_numbers = #tpu.dot_dimension_numbers<[1], [0], [0], [1], [0, 0, 1, 1], [], []>} : vector<8x16xf32>, vector<16x128xf32>, vector<8x128xf32> -> vector<8x128xf32>
    %c1_65 = arith.constant 1 : index
    %c0_66 = arith.constant 0 : index
    %c0_67 = arith.constant 0 : index
    %82 = vector.load %arg9[%c1_65, %c0_66, %c0_67] : memref<2x8x16xf32, #tpu.memory_space<vmem>>, vector<1x8x16xf32>
    %83 = vector.shape_cast %82 : vector<1x8x16xf32> to vector<8x16xf32>
    %cst_68 = arith.constant dense<0.000000e+00> : vector<8x128xf32>
    %84 = tpu.matmul %83, %78, %cst_68 {dimension_numbers = #tpu.dot_dimension_numbers<[1], [0], [0], [1], [0, 0, 1, 1], [], []>} : vector<8x16xf32>, vector<16x128xf32>, vector<8x128xf32> -> vector<8x128xf32>
    %c0_69 = arith.constant 0 : index
    %c0_70 = arith.constant 0 : index
    %c0_71 = arith.constant 0 : index
    %85 = vector.load %arg10[%c0_69, %c0_70, %c0_71] : memref<2x128x64xf32, #tpu.memory_space<vmem>>, vector<1x128x64xf32>
    %86 = vector.shape_cast %85 : vector<1x128x64xf32> to vector<128x64xf32>
    %cst_72 = arith.constant dense<0.000000e+00> : vector<8x64xf32>
    %87 = tpu.matmul %81, %86, %cst_72 {dimension_numbers = #tpu.dot_dimension_numbers<[1], [0], [0], [1], [0, 0, 1, 1], [], []>} : vector<8x128xf32>, vector<128x64xf32>, vector<8x64xf32> -> vector<8x64xf32>
    %c1_73 = arith.constant 1 : index
    %c0_74 = arith.constant 0 : index
    %c0_75 = arith.constant 0 : index
    %88 = vector.load %arg10[%c1_73, %c0_74, %c0_75] : memref<2x128x64xf32, #tpu.memory_space<vmem>>, vector<1x128x64xf32>
    %89 = vector.shape_cast %88 : vector<1x128x64xf32> to vector<128x64xf32>
    %cst_76 = arith.constant dense<0.000000e+00> : vector<8x64xf32>
    %90 = tpu.matmul %81, %89, %cst_76 {dimension_numbers = #tpu.dot_dimension_numbers<[1], [0], [0], [1], [0, 0, 1, 1], [], []>} : vector<8x128xf32>, vector<128x64xf32>, vector<8x64xf32> -> vector<8x64xf32>
    %91 = arith.maximumf %87, %90 : vector<8x64xf32>
    %c0_77 = arith.constant 0 : index
    %c0_78 = arith.constant 0 : index
    %c0_79 = arith.constant 0 : index
    %92 = vector.load %arg10[%c0_77, %c0_78, %c0_79] : memref<2x128x64xf32, #tpu.memory_space<vmem>>, vector<1x128x64xf32>
    %93 = vector.shape_cast %92 : vector<1x128x64xf32> to vector<128x64xf32>
    %cst_80 = arith.constant dense<0.000000e+00> : vector<8x64xf32>
    %94 = tpu.matmul %84, %93, %cst_80 {dimension_numbers = #tpu.dot_dimension_numbers<[1], [0], [0], [1], [0, 0, 1, 1], [], []>} : vector<8x128xf32>, vector<128x64xf32>, vector<8x64xf32> -> vector<8x64xf32>
    %c1_81 = arith.constant 1 : index
    %c0_82 = arith.constant 0 : index
    %c0_83 = arith.constant 0 : index
    %95 = vector.load %arg10[%c1_81, %c0_82, %c0_83] : memref<2x128x64xf32, #tpu.memory_space<vmem>>, vector<1x128x64xf32>
    %96 = vector.shape_cast %95 : vector<1x128x64xf32> to vector<128x64xf32>
    %cst_84 = arith.constant dense<0.000000e+00> : vector<8x64xf32>
    %97 = tpu.matmul %84, %96, %cst_84 {dimension_numbers = #tpu.dot_dimension_numbers<[1], [0], [0], [1], [0, 0, 1, 1], [], []>} : vector<8x128xf32>, vector<128x64xf32>, vector<8x64xf32> -> vector<8x64xf32>
    %98 = arith.maximumf %94, %97 : vector<8x64xf32>
    %99 = arith.maximumf %91, %98 : vector<8x64xf32>
    %c0_85 = arith.constant 0 : index
    %c0_86 = arith.constant 0 : index
    %100 = vector.load %arg11[%c0_85, %c0_86] : memref<64x84xf32, #tpu.memory_space<vmem>>, vector<64x84xf32>
    %cst_87 = arith.constant dense<0.000000e+00> : vector<8x84xf32>
    %101 = tpu.matmul %99, %100, %cst_87 {dimension_numbers = #tpu.dot_dimension_numbers<[1], [0], [0], [1], [0, 0, 1, 1], [], []>} : vector<8x64xf32>, vector<64x84xf32>, vector<8x84xf32> -> vector<8x84xf32>
    %c0_88 = arith.constant 0 : index
    %c0_89 = arith.constant 0 : index
    %102 = vector.load %arg12[%c0_88, %c0_89] : memref<1x84xf32, #tpu.memory_space<vmem>>, vector<1x84xf32>
    %103 = vector.broadcast %102 : vector<1x84xf32> to vector<8x84xf32>
    %104 = arith.addf %101, %103 : vector<8x84xf32>
    %c0_90 = arith.constant 0 : index
    %c0_91 = arith.constant 0 : index
    %105 = vector.load %arg13[%c0_90, %c0_91] : memref<8x84xf32, #tpu.memory_space<vmem>>, vector<8x84xf32>
    %c0_92 = arith.constant 0 : index
    %c0_93 = arith.constant 0 : index
    %106 = vector.load %arg14[%c0_92, %c0_93] : memref<8x84xf32, #tpu.memory_space<vmem>>, vector<8x84xf32>
    %c0_94 = arith.constant 0 : index
    %c0_95 = arith.constant 0 : index
    %107 = vector.load %arg15[%c0_94, %c0_95] : memref<8x84xf32, #tpu.memory_space<vmem>>, vector<8x84xf32>
    %108 = arith.negf %104 : vector<8x84xf32>
    %109 = math.exp %108 : vector<8x84xf32>
    %cst_96 = arith.constant 1.000000e+00 : f32
    %110 = vector.broadcast %cst_96 : f32 to vector<8x84xf32>
    %111 = arith.addf %110, %109 : vector<8x84xf32>
    %112 = arith.divf %110, %111 : vector<8x84xf32>
    %cst_97 = arith.constant 4.000000e+00 : f32
    %113 = vector.broadcast %cst_97 : f32 to vector<8x84xf32>
    %114 = arith.mulf %112, %113 : vector<8x84xf32>
    %115 = arith.addf %114, %105 : vector<8x84xf32>
    %116 = math.exp %104 : vector<8x84xf32>
    %117 = arith.mulf %116, %106 : vector<8x84xf32>
    %cst_98 = arith.constant 5.000000e-01 : f32
    %118 = vector.broadcast %cst_98 : f32 to vector<8x84xf32>
    %119 = arith.cmpf olt, %107, %118 : vector<8x84xf32>
    %cst_99 = arith.constant 1.500000e+00 : f32
    %120 = vector.broadcast %cst_99 : f32 to vector<8x84xf32>
    %121 = arith.cmpf olt, %107, %120 : vector<8x84xf32>
    %122 = arith.select %121, %117, %112 : vector<8x84xi1>, vector<8x84xf32>
    %123 = arith.select %119, %115, %122 : vector<8x84xi1>, vector<8x84xf32>
    %c0_100 = arith.constant 0 : index
    %c0_101 = arith.constant 0 : index
    %124 = vector.load %arg23[%c0_100, %c0_101] : memref<8x84xf32, #tpu.memory_space<vmem>>, vector<8x84xf32>
    tpu.vector_store %arg23[%c0_100, %c0_101], %123 {strides = array<i32>} : memref<8x84xf32, #tpu.memory_space<vmem>>, vector<8x84xf32>,
    %c0_102 = arith.constant 0 : index
    %c0_103 = arith.constant 0 : index
    %125 = vector.load %arg16[%c0_102, %c0_103] : memref<16x8xf32, #tpu.memory_space<vmem>>, vector<16x8xf32>
    %cst_104 = arith.constant dense<0.000000e+00> : vector<16x64xf32>
    %126 = tpu.matmul %125, %99, %cst_104 {dimension_numbers = #tpu.dot_dimension_numbers<[1], [0], [0], [1], [0, 0, 1, 1], [], []>} : vector<16x8xf32>, vector<8x64xf32>, vector<16x64xf32> -> vector<16x64xf32>
    %c0_105 = arith.constant 0 : index
    %c0_106 = arith.constant 0 : index
    %127 = vector.load %arg17[%c0_105, %c0_106] : memref<64x128xf32, #tpu.memory_space<vmem>>, vector<64x128xf32>
    %cst_107 = arith.constant dense<0.000000e+00> : vector<16x128xf32>
    %128 = tpu.matmul %126, %127, %cst_107 {dimension_numbers = #tpu.dot_dimension_numbers<[1], [0], [0], [1], [0, 0, 1, 1], [], []>} : vector<16x64xf32>, vector<64x128xf32>, vector<16x128xf32> -> vector<16x128xf32>
    %c0_108 = arith.constant 0 : index
    %c0_109 = arith.constant 0 : index
    %c0_110 = arith.constant 0 : index
    %129 = vector.load %arg18[%c0_108, %c0_109, %c0_110] : memref<2x128x168xf32, #tpu.memory_space<vmem>>, vector<1x128x168xf32>
    %130 = vector.shape_cast %129 : vector<1x128x168xf32> to vector<128x168xf32>
    %cst_111 = arith.constant dense<0.000000e+00> : vector<16x168xf32>
    %131 = tpu.matmul %128, %130, %cst_111 {dimension_numbers = #tpu.dot_dimension_numbers<[1], [0], [0], [1], [0, 0, 1, 1], [], []>} : vector<16x128xf32>, vector<128x168xf32>, vector<16x168xf32> -> vector<16x168xf32>
    %c1_112 = arith.constant 1 : index
    %c0_113 = arith.constant 0 : index
    %c0_114 = arith.constant 0 : index
    %132 = vector.load %arg18[%c1_112, %c0_113, %c0_114] : memref<2x128x168xf32, #tpu.memory_space<vmem>>, vector<1x128x168xf32>
    %133 = vector.shape_cast %132 : vector<1x128x168xf32> to vector<128x168xf32>
    %cst_115 = arith.constant dense<0.000000e+00> : vector<16x168xf32>
    %134 = tpu.matmul %56, %133, %cst_115 {dimension_numbers = #tpu.dot_dimension_numbers<[1], [0], [0], [1], [0, 0, 1, 1], [], []>} : vector<16x128xf32>, vector<128x168xf32>, vector<16x168xf32> -> vector<16x168xf32>
    %135 = arith.addf %131, %134 : vector<16x168xf32>
    %c0_116 = arith.constant 0 : index
    %c0_117 = arith.constant 0 : index
    %136 = vector.load %arg19[%c0_116, %c0_117] : memref<1x168xf32, #tpu.memory_space<vmem>>, vector<1x168xf32>
    %137 = vector.broadcast %136 : vector<1x168xf32> to vector<16x168xf32>
    %138 = arith.addf %135, %137 : vector<16x168xf32>
    %c0_118 = arith.constant 0 : index
    %c0_119 = arith.constant 0 : index
    %139 = vector.load %arg20[%c0_118, %c0_119] : memref<16x168xf32, #tpu.memory_space<vmem>>, vector<16x168xf32>
    %c0_120 = arith.constant 0 : index
    %c0_121 = arith.constant 0 : index
    %140 = vector.load %arg21[%c0_120, %c0_121] : memref<16x168xf32, #tpu.memory_space<vmem>>, vector<16x168xf32>
    %c0_122 = arith.constant 0 : index
    %c0_123 = arith.constant 0 : index
    %141 = vector.load %arg22[%c0_122, %c0_123] : memref<16x168xf32, #tpu.memory_space<vmem>>, vector<16x168xf32>
    %142 = arith.negf %138 : vector<16x168xf32>
    %143 = math.exp %142 : vector<16x168xf32>
    %cst_124 = arith.constant 1.000000e+00 : f32
    %144 = vector.broadcast %cst_124 : f32 to vector<16x168xf32>
    %145 = arith.addf %144, %143 : vector<16x168xf32>
    %146 = arith.divf %144, %145 : vector<16x168xf32>
    %cst_125 = arith.constant 2.000000e+00 : f32
    %147 = vector.broadcast %cst_125 : f32 to vector<16x168xf32>
    %148 = arith.mulf %146, %147 : vector<16x168xf32>
    %149 = arith.addf %148, %139 : vector<16x168xf32>
    %150 = math.exp %138 : vector<16x168xf32>
    %151 = arith.mulf %150, %140 : vector<16x168xf32>
    %cst_126 = arith.constant 5.000000e-01 : f32
    %152 = vector.broadcast %cst_126 : f32 to vector<16x168xf32>
    %153 = arith.cmpf olt, %141, %152 : vector<16x168xf32>
    %cst_127 = arith.constant 1.500000e+00 : f32
    %154 = vector.broadcast %cst_127 : f32 to vector<16x168xf32>
    %155 = arith.cmpf olt, %141, %154 : vector<16x168xf32>
    %156 = arith.select %155, %151, %146 : vector<16x168xi1>, vector<16x168xf32>
    %157 = arith.select %153, %149, %156 : vector<16x168xi1>, vector<16x168xf32>
    %c0_128 = arith.constant 0 : index
    %c0_129 = arith.constant 0 : index
    %158 = vector.load %arg24[%c0_128, %c0_129] : memref<16x168xf32, #tpu.memory_space<vmem>>, vector<16x168xf32>
    tpu.vector_store %arg24[%c0_128, %c0_129], %157 {strides = array<i32>} : memref<16x168xf32, #tpu.memory_space<vmem>>, vector<16x168xf32>,
    return
  }
}

</mosaic_0001>

<llo_original>
// kernel: forward.1
$region0: #{forward.1}
  #allocation0 [shape = 'u32[]', space=smem, size = 0x4, offset = 0x4, fixed_abs, tag = 'smem constant byte address 0x4 - core index']
  #allocation1 [shape = 'u32[72,128]{1,0:T(1,128)}', space=vmem, size = 0x9000, scoped, tag = 'internal scratch']
  %s0 = inlined_call_operand.vmem [shape: f32[32,128], index: 0, kind: input, shape index: {}]
  %s1 = inlined_call_operand.hbm [shape: f32[3,32,32], index: 1, kind: input, shape index: {}]
  %s2 = inlined_call_operand.vmem [shape: f32[3,128,128], index: 2, kind: input, shape index: {}]
  %s3 = inlined_call_operand.vmem [shape: f32[1,128], index: 3, kind: input, shape index: {}]
  %s4 = inlined_call_operand.hbm [shape: f32[3,16,32], index: 4, kind: input, shape index: {}]
  %s5 = inlined_call_operand.hbm [shape: f32[3,128,128], index: 5, kind: input, shape index: {}]
  %s6 = inlined_call_operand.vmem [shape: f32[1,128], index: 6, kind: input, shape index: {}]
  %s7 = inlined_call_operand.hbm [shape: f32[128,128], index: 7, kind: input, shape index: {}]
  %s8 = inlined_call_operand.vmem [shape: f32[1,128], index: 8, kind: input, shape index: {}]
  %s9 = inlined_call_operand.hbm [shape: f32[2,8,16], index: 9, kind: input, shape index: {}]
  %s10 = inlined_call_operand.vmem [shape: f32[2,128,64], index: 10, kind: input, shape index: {}]
  %s11 = inlined_call_operand.hbm [shape: f32[64,84], index: 11, kind: input, shape index: {}]
  %s12 = inlined_call_operand.hbm [shape: f32[1,84], index: 12, kind: input, shape index: {}]
  %s13 = inlined_call_operand.hbm [shape: f32[8,84], index: 13, kind: input, shape index: {}]
  %s14 = inlined_call_operand.hbm [shape: f32[8,84], index: 14, kind: input, shape index: {}]
  %s15 = inlined_call_operand.hbm [shape: f32[8,84], index: 15, kind: input, shape index: {}]
  %s16 = inlined_call_operand.hbm [shape: f32[16,8], index: 16, kind: input, shape index: {}]
  %s17 = inlined_call_operand.hbm [shape: f32[64,128], index: 17, kind: input, shape index: {}]
  %s18 = inlined_call_operand.vmem [shape: f32[2,128,168], index: 18, kind: input, shape index: {}]
  %s19 = inlined_call_operand.hbm [shape: f32[1,168], index: 19, kind: input, shape index: {}]
  %s20 = inlined_call_operand.vmem [shape: f32[16,168], index: 20, kind: input, shape index: {}]
  %s21 = inlined_call_operand.hbm [shape: f32[16,168], index: 21, kind: input, shape index: {}]
  %s22 = inlined_call_operand.hbm [shape: f32[16,168], index: 22, kind: input, shape index: {}]
  %s23 = inlined_call_operand.vmem [shape: f32[8,84], index: 23, kind: output, shape index: {0}]
  %s24 = inlined_call_operand.vmem [shape: f32[16,168], index: 24, kind: output, shape index: {1}]
  %25 = xla_tuple %s23, %s24
  %s26 = sld [smem:[#allocation0]]
  $region170: #{forward.1} parent=0
    _
  %s28 = ssub.s32 1, %s26
  %s29 = scalar_select 0, %s28, %s26
  $region1: #{forward.1} parent=0
    #allocation2 [shape = 'u8[49152]{0}', space=vmem, size = 0xc000, scoped, tag = 'input window, operand 1, single buffered']
    #allocation3 [shape = 's32[1]{0}', space=sflag, size = 0x4, scoped, tag = 'scoped memory for forward.1']
    #allocation4 [shape = 'u8[24576]{0}', space=vmem, size = 0x6000, scoped, tag = 'input window, operand 4, single buffered']
    #allocation5 [shape = 's32[1]{0}', space=sflag, size = 0x4, scoped, tag = 'scoped memory for forward.1']
    #allocation6 [shape = 'u8[196608]{0}', space=vmem, size = 0x30000, scoped, tag = 'input window, operand 5, single buffered']
    #allocation7 [shape = 'u8[65536]{0}', space=vmem, size = 0x10000, scoped, tag = 'input window, operand 7, single buffered']
    #allocation8 [shape = 's32[1]{0}', space=sflag, size = 0x4, scoped, tag = 'scoped memory for forward.1']
    #allocation9 [shape = 'u8[8192]{0}', space=vmem, size = 0x2000, scoped, tag = 'input window, operand 9, single buffered']
    #allocation10 [shape = 'u8[32768]{0}', space=vmem, size = 0x8000, scoped, tag = 'input window, operand 11, single buffered']
    #allocation11 [shape = 's32[1]{0}', space=sflag, size = 0x4, scoped, tag = 'scoped memory for forward.1']
    #allocation12 [shape = 'u8[512]{0}', space=vmem, size = 0x400, scoped, tag = 'input window, operand 12, single buffered']
    #allocation13 [shape = 'u8[4096]{0}', space=vmem, size = 0x1000, scoped, tag = 'input window, operand 13, single buffered']
    #allocation14 [shape = 's32[1]{0}', space=sflag, size = 0x4, scoped, tag = 'scoped memory for forward.1']
    #allocation15 [shape = 'u8[4096]{0}', space=vmem, size = 0x1000, scoped, tag = 'input window, operand 14, single buffered']
    #allocation16 [shape = 'u8[4096]{0}', space=vmem, size = 0x1000, scoped, tag = 'input window, operand 15, single buffered']
    #allocation17 [shape = 's32[1]{0}', space=sflag, size = 0x4, scoped, tag = 'scoped memory for forward.1']
    #allocation18 [shape = 'u8[8192]{0}', space=vmem, size = 0x2000, scoped, tag = 'input window, operand 16, single buffered']
    #allocation19 [shape = 'u8[32768]{0}', space=vmem, size = 0x8000, scoped, tag = 'input window, operand 17, single buffered']
    #allocation20 [shape = 's32[1]{0}', space=sflag, size = 0x4, scoped, tag = 'scoped memory for forward.1']
    #allocation21 [shape = 'u8[1024]{0}', space=vmem, size = 0x400, scoped, tag = 'input window, operand 19, single buffered']
    #allocation22 [shape = 'u8[16384]{0}', space=vmem, size = 0x4000, scoped, tag = 'input window, operand 21, single buffered']
    #allocation23 [shape = 's32[1]{0}', space=sflag, size = 0x4, scoped, tag = 'scoped memory for forward.1']
    #allocation24 [shape = 'u8[16384]{0}', space=vmem, size = 0x4000, scoped, tag = 'input window, operand 22, single buffered']
    %30 = vsyncpa [#allocation3], 0
    %31 = vsyncpa [#allocation5], 0
    %32 = vsyncpa [#allocation8], 0
    %33 = vsyncpa [#allocation11], 0
    %34 = vsyncpa [#allocation14], 0
    %35 = vsyncpa [#allocation17], 0
    %36 = vsyncpa [#allocation20], 0
    %37 = vsyncpa [#allocation23], 0
    // Predicated region
    $region2: #{forward.1} parent=1 // pred_check
      _
    $region3: #{forward.1} parent=1 // pred_check_branch
      %39 = sbr.rel (0) target = $region5
    $region4: #{forward.1} parent=1 // pred_region
      _
    $region5: #{forward.1} parent=1 // pred_fallthru
      _
    // Predicated region
    $region6: #{forward.1} parent=1 // pred_check
      _
    $region7: #{forward.1} parent=1 // pred_check_branch
      %41 = sbr.rel (0) target = $region9
    $region8: #{forward.1} parent=1 // pred_region
      %43 = vsyncadd [#allocation3], 0
      %s44 = sshll.u32 %s1, 4
      %s45 = int_to_ptr.hbm [resolvable:$true] %s44
      %s46 = sshll.u32 [#allocation2], 4
      %s47 = int_to_ptr.vmem [resolvable:$true] %s46
      %52 = dma.hbm_to_vmem [thread:$0]  %s45, 1536, %s47, [#allocation3], 128, 128, 8
    $region9: #{forward.1} parent=1 // pred_fallthru
      _
    // Predicated region
    $region10: #{forward.1} parent=1 // pred_check
      _
    $region11: #{forward.1} parent=1 // pred_check_branch
      %54 = sbr.rel (0) target = $region13
    $region12: #{forward.1} parent=1 // pred_region
      _
    $region13: #{forward.1} parent=1 // pred_fallthru
      _
    // Predicated region
    $region14: #{forward.1} parent=1 // pred_check
      _
    $region15: #{forward.1} parent=1 // pred_check_branch
      %56 = sbr.rel (0) target = $region17
    $region16: #{forward.1} parent=1 // pred_region
      _
    $region17: #{forward.1} parent=1 // pred_fallthru
      _
    // Predicated region
    $region18: #{forward.1} parent=1 // pred_check
      _
    $region19: #{forward.1} parent=1 // pred_check_branch
      %58 = sbr.rel (0) target = $region21
    $region20: #{forward.1} parent=1 // pred_region
      %60 = vsyncadd [#allocation5], 0
      %s61 = sshll.u32 %s4, 4
      %s62 = int_to_ptr.hbm [resolvable:$true] %s61
      %s63 = sshll.u32 [#allocation4], 4
      %s64 = int_to_ptr.vmem [resolvable:$true] %s63
      %69 = dma.hbm_to_vmem [thread:$0]  %s62, 768, %s64, [#allocation5], 128, 128, 8
    $region21: #{forward.1} parent=1 // pred_fallthru
      _
    // Predicated region
    $region22: #{forward.1} parent=1 // pred_check
      _
    $region23: #{forward.1} parent=1 // pred_check_branch
      %71 = sbr.rel (0) target = $region25
    $region24: #{forward.1} parent=1 // pred_region
      %73 = vsyncadd [#allocation5], 0
      %s74 = sshll.u32 %s5, 4
      %s75 = int_to_ptr.hbm [resolvable:$true] %s74
      %s76 = sshll.u32 [#allocation6], 4
      %s77 = int_to_ptr.vmem [resolvable:$true] %s76
      %82 = dma.hbm_to_vmem [thread:$0]  %s75, 6144, %s77, [#allocation5], 128, 128, 8
    $region25: #{forward.1} parent=1 // pred_fallthru
      _
    // Predicated region
    $region26: #{forward.1} parent=1 // pred_check
      _
    $region27: #{forward.1} parent=1 // pred_check_branch
      %84 = sbr.rel (0) target = $region29
    $region28: #{forward.1} parent=1 // pred_region
      _
    $region29: #{forward.1} parent=1 // pred_fallthru
      _
    // Predicated region
    $region30: #{forward.1} parent=1 // pred_check
      _
    $region31: #{forward.1} parent=1 // pred_check_branch
      %86 = sbr.rel (0) target = $region33
    $region32: #{forward.1} parent=1 // pred_region
      %88 = vsyncadd [#allocation8], 0
      %s89 = sshll.u32 %s7, 4
      %s90 = int_to_ptr.hbm [resolvable:$true] %s89
      %s91 = sshll.u32 [#allocation7], 4
      %s92 = int_to_ptr.vmem [resolvable:$true] %s91
      %97 = dma.hbm_to_vmem [thread:$0]  %s90, 2048, %s92, [#allocation8], 128, 128, 8
    $region33: #{forward.1} parent=1 // pred_fallthru
      _
    // Predicated region
    $region34: #{forward.1} parent=1 // pred_check
      _
    $region35: #{forward.1} parent=1 // pred_check_branch
      %99 = sbr.rel (0) target = $region37
    $region36: #{forward.1} parent=1 // pred_region
      _
    $region37: #{forward.1} parent=1 // pred_fallthru
      _
    // Predicated region
    $region38: #{forward.1} parent=1 // pred_check
      _
    $region39: #{forward.1} parent=1 // pred_check_branch
      %101 = sbr.rel (0) target = $region41
    $region40: #{forward.1} parent=1 // pred_region
      %103 = vsyncadd [#allocation8], 0
      %s104 = sshll.u32 %s9, 4
      %s105 = int_to_ptr.hbm [resolvable:$true] %s104
      %s106 = sshll.u32 [#allocation9], 4
      %s107 = int_to_ptr.vmem [resolvable:$true] %s106
      %112 = dma.hbm_to_vmem [thread:$0]  %s105, 256, %s107, [#allocation8], 128, 128, 8
    $region41: #{forward.1} parent=1 // pred_fallthru
      _
    // Predicated region
    $region42: #{forward.1} parent=1 // pred_check
      _
    $region43: #{forward.1} parent=1 // pred_check_branch
      %114 = sbr.rel (0) target = $region45
    $region44: #{forward.1} parent=1 // pred_region
      _
    $region45: #{forward.1} parent=1 // pred_fallthru
      _
    // Predicated region
    $region46: #{forward.1} parent=1 // pred_check
      _
    $region47: #{forward.1} parent=1 // pred_check_branch
      %116 = sbr.rel (0) target = $region49
    $region48: #{forward.1} parent=1 // pred_region
      %118 = vsyncadd [#allocation11], 0
      %s119 = sshll.u32 %s11, 4
      %s120 = int_to_ptr.hbm [resolvable:$true] %s119
      %s121 = sshll.u32 [#allocation10], 4
      %s122 = int_to_ptr.vmem [resolvable:$true] %s121
      %127 = dma.hbm_to_vmem [thread:$0]  %s120, 1024, %s122, [#allocation11], 128, 128, 8
    $region49: #{forward.1} parent=1 // pred_fallthru
      _
    // Predicated region
    $region50: #{forward.1} parent=1 // pred_check
      _
    $region51: #{forward.1} parent=1 // pred_check_branch
      %129 = sbr.rel (0) target = $region53
    $region52: #{forward.1} parent=1 // pred_region
      %131 = vsyncadd [#allocation11], 0
      %s133 = sshll.u32 %s12, 4
      %s134 = int_to_ptr.hbm [resolvable:$true] %s133
      %s135 = sshll.u32 [#allocation12], 4
      %s136 = int_to_ptr.vmem [resolvable:$true] %s135
      %138 = dma.hbm_to_vmem [thread:$0]  %s134, 16, %s136, [#allocation11]
    $region53: #{forward.1} parent=1 // pred_fallthru
      _
    // Predicated region
    $region54: #{forward.1} parent=1 // pred_check
      _
    $region55: #{forward.1} parent=1 // pred_check_branch
      %140 = sbr.rel (0) target = $region57
    $region56: #{forward.1} parent=1 // pred_region
      %142 = vsyncadd [#allocation14], 0
      %s144 = sshll.u32 %s13, 4
      %s145 = int_to_ptr.hbm [resolvable:$true] %s144
      %s146 = sshll.u32 [#allocation13], 4
      %s147 = int_to_ptr.vmem [resolvable:$true] %s146
      %149 = dma.hbm_to_vmem [thread:$0]  %s145, 128, %s147, [#allocation14]
    $region57: #{forward.1} parent=1 // pred_fallthru
      _
    // Predicated region
    $region58: #{forward.1} parent=1 // pred_check
      _
    $region59: #{forward.1} parent=1 // pred_check_branch
      %151 = sbr.rel (0) target = $region61
    $region60: #{forward.1} parent=1 // pred_region
      %153 = vsyncadd [#allocation14], 0
      %s155 = sshll.u32 %s14, 4
      %s156 = int_to_ptr.hbm [resolvable:$true] %s155
      %s157 = sshll.u32 [#allocation15], 4
      %s158 = int_to_ptr.vmem [resolvable:$true] %s157
      %160 = dma.hbm_to_vmem [thread:$0]  %s156, 128, %s158, [#allocation14]
    $region61: #{forward.1} parent=1 // pred_fallthru
      _
    // Predicated region
    $region62: #{forward.1} parent=1 // pred_check
      _
    $region63: #{forward.1} parent=1 // pred_check_branch
      %162 = sbr.rel (0) target = $region65
    $region64: #{forward.1} parent=1 // pred_region
      %164 = vsyncadd [#allocation17], 0
      %s166 = sshll.u32 %s15, 4
      %s167 = int_to_ptr.hbm [resolvable:$true] %s166
      %s168 = sshll.u32 [#allocation16], 4
      %s169 = int_to_ptr.vmem [resolvable:$true] %s168
      %171 = dma.hbm_to_vmem [thread:$0]  %s167, 128, %s169, [#allocation17]
    $region65: #{forward.1} parent=1 // pred_fallthru
      _
    // Predicated region
    $region66: #{forward.1} parent=1 // pred_check
      _
    $region67: #{forward.1} parent=1 // pred_check_branch
      %173 = sbr.rel (0) target = $region69
    $region68: #{forward.1} parent=1 // pred_region
      %175 = vsyncadd [#allocation17], 0
      %s176 = sshll.u32 %s16, 4
      %s177 = int_to_ptr.hbm [resolvable:$true] %s176
      %s178 = sshll.u32 [#allocation18], 4
      %s179 = int_to_ptr.vmem [resolvable:$true] %s178
      %184 = dma.hbm_to_vmem [thread:$0]  %s177, 256, %s179, [#allocation17], 128, 128, 8
    $region69: #{forward.1} parent=1 // pred_fallthru
      _
    // Predicated region
    $region70: #{forward.1} parent=1 // pred_check
      _
    $region71: #{forward.1} parent=1 // pred_check_branch
      %186 = sbr.rel (0) target = $region73
    $region72: #{forward.1} parent=1 // pred_region
      %188 = vsyncadd [#allocation20], 0
      %s189 = sshll.u32 %s17, 4
      %s190 = int_to_ptr.hbm [resolvable:$true] %s189
      %s191 = sshll.u32 [#allocation19], 4
      %s192 = int_to_ptr.vmem [resolvable:$true] %s191
      %197 = dma.hbm_to_vmem [thread:$0]  %s190, 1024, %s192, [#allocation20], 128, 128, 8
    $region73: #{forward.1} parent=1 // pred_fallthru
      _
    // Predicated region
    $region74: #{forward.1} parent=1 // pred_check
      _
    $region75: #{forward.1} parent=1 // pred_check_branch
      %199 = sbr.rel (0) target = $region77
    $region76: #{forward.1} parent=1 // pred_region
      _
    $region77: #{forward.1} parent=1 // pred_fallthru
      _
    // Predicated region
    $region78: #{forward.1} parent=1 // pred_check
      _
    $region79: #{forward.1} parent=1 // pred_check_branch
      %201 = sbr.rel (0) target = $region81
    $region80: #{forward.1} parent=1 // pred_region
      %203 = vsyncadd [#allocation20], 0
      %s205 = sshll.u32 %s19, 4
      %s206 = int_to_ptr.hbm [resolvable:$true] %s205
      %s207 = sshll.u32 [#allocation21], 4
      %s208 = int_to_ptr.vmem [resolvable:$true] %s207
      %210 = dma.hbm_to_vmem [thread:$0]  %s206, 32, %s208, [#allocation20]
    $region81: #{forward.1} parent=1 // pred_fallthru
      _
    // Predicated region
    $region82: #{forward.1} parent=1 // pred_check
      _
    $region83: #{forward.1} parent=1 // pred_check_branch
      %212 = sbr.rel (0) target = $region85
    $region84: #{forward.1} parent=1 // pred_region
      _
    $region85: #{forward.1} parent=1 // pred_fallthru
      _
    // Predicated region
    $region86: #{forward.1} parent=1 // pred_check
      _
    $region87: #{forward.1} parent=1 // pred_check_branch
      %214 = sbr.rel (0) target = $region89
    $region88: #{forward.1} parent=1 // pred_region
      %216 = vsyncadd [#allocation23], 0
      %s217 = sshll.u32 %s21, 4
      %s218 = int_to_ptr.hbm [resolvable:$true] %s217
      %s219 = sshll.u32 [#allocation22], 4
      %s220 = int_to_ptr.vmem [resolvable:$true] %s219
      %225 = dma.hbm_to_vmem [thread:$0]  %s218, 512, %s220, [#allocation23], 256, 256, 16
    $region89: #{forward.1} parent=1 // pred_fallthru
      _
    // Predicated region
    $region90: #{forward.1} parent=1 // pred_check
      _
    $region91: #{forward.1} parent=1 // pred_check_branch
      %227 = sbr.rel (0) target = $region93
    $region92: #{forward.1} parent=1 // pred_region
      %229 = vsyncadd [#allocation23], 0
      %s230 = sshll.u32 %s22, 4
      %s231 = int_to_ptr.hbm [resolvable:$true] %s230
      %s232 = sshll.u32 [#allocation24], 4
      %s233 = int_to_ptr.vmem [resolvable:$true] %s232
      %238 = dma.hbm_to_vmem [thread:$0]  %s231, 512, %s233, [#allocation23], 256, 256, 16
    $region93: #{forward.1} parent=1 // pred_fallthru
      _
    // Predicated region
    $region94: #{forward.1} parent=1 // pred_check
      _
    $region95: #{forward.1} parent=1 // pred_check_branch
      %240 = sbr.rel (0) target = $region97
    $region96: #{forward.1} parent=1 // pred_region
      %242 = dma.done [#allocation3], 1536
    $region97: #{forward.1} parent=1 // pred_fallthru
      _
    // Predicated region
    $region98: #{forward.1} parent=1 // pred_check
      _
    $region99: #{forward.1} parent=1 // pred_check_branch
      %244 = sbr.rel (0) target = $region101
    $region100: #{forward.1} parent=1 // pred_region
      %246 = dma.done [#allocation5], 768
    $region101: #{forward.1} parent=1 // pred_fallthru
      _
    // Predicated region
    $region102: #{forward.1} parent=1 // pred_check
      _
    $region103: #{forward.1} parent=1 // pred_check_branch
      %248 = sbr.rel (0) target = $region105
    $region104: #{forward.1} parent=1 // pred_region
      %250 = dma.done [#allocation5], 6144
    $region105: #{forward.1} parent=1 // pred_fallthru
      _
    // Predicated region
    $region106: #{forward.1} parent=1 // pred_check
      _
    $region107: #{forward.1} parent=1 // pred_check_branch
      %252 = sbr.rel (0) target = $region109
    $region108: #{forward.1} parent=1 // pred_region
      %254 = dma.done [#allocation8], 2048
    $region109: #{forward.1} parent=1 // pred_fallthru
      _
    // Predicated region
    $region110: #{forward.1} parent=1 // pred_check
      _
    $region111: #{forward.1} parent=1 // pred_check_branch
      %256 = sbr.rel (0) target = $region113
    $region112: #{forward.1} parent=1 // pred_region
      %258 = dma.done [#allocation8], 256
    $region113: #{forward.1} parent=1 // pred_fallthru
      _
    // Predicated region
    $region114: #{forward.1} parent=1 // pred_check
      _
    $region115: #{forward.1} parent=1 // pred_check_branch
      %260 = sbr.rel (0) target = $region117
    $region116: #{forward.1} parent=1 // pred_region
      %262 = dma.done [#allocation11], 1024
    $region117: #{forward.1} parent=1 // pred_fallthru
      _
    // Predicated region
    $region118: #{forward.1} parent=1 // pred_check
      _
    $region119: #{forward.1} parent=1 // pred_check_branch
      %264 = sbr.rel (0) target = $region121
    $region120: #{forward.1} parent=1 // pred_region
      %266 = dma.done [#allocation11], 16
    $region121: #{forward.1} parent=1 // pred_fallthru
      _
    // Predicated region
    $region122: #{forward.1} parent=1 // pred_check
      _
    $region123: #{forward.1} parent=1 // pred_check_branch
      %268 = sbr.rel (0) target = $region125
    $region124: #{forward.1} parent=1 // pred_region
      %270 = dma.done [#allocation14], 128
    $region125: #{forward.1} parent=1 // pred_fallthru
      _
    // Predicated region
    $region126: #{forward.1} parent=1 // pred_check
      _
    $region127: #{forward.1} parent=1 // pred_check_branch
      %272 = sbr.rel (0) target = $region129
    $region128: #{forward.1} parent=1 // pred_region
      %274 = dma.done [#allocation14], 128
    $region129: #{forward.1} parent=1 // pred_fallthru
      _
    // Predicated region
    $region130: #{forward.1} parent=1 // pred_check
      _
    $region131: #{forward.1} parent=1 // pred_check_branch
      %276 = sbr.rel (0) target = $region133
    $region132: #{forward.1} parent=1 // pred_region
      %278 = dma.done [#allocation17], 128
    $region133: #{forward.1} parent=1 // pred_fallthru
      _
    // Predicated region
    $region134: #{forward.1} parent=1 // pred_check
      _
    $region135: #{forward.1} parent=1 // pred_check_branch
      %280 = sbr.rel (0) target = $region137
    $region136: #{forward.1} parent=1 // pred_region
      %282 = dma.done [#allocation17], 256
    $region137: #{forward.1} parent=1 // pred_fallthru
      _
    // Predicated region
    $region138: #{forward.1} parent=1 // pred_check
      _
    $region139: #{forward.1} parent=1 // pred_check_branch
      %284 = sbr.rel (0) target = $region141
    $region140: #{forward.1} parent=1 // pred_region
      %286 = dma.done [#allocation20], 1024
    $region141: #{forward.1} parent=1 // pred_fallthru
      _
    // Predicated region
    $region142: #{forward.1} parent=1 // pred_check
      _
    $region143: #{forward.1} parent=1 // pred_check_branch
      %288 = sbr.rel (0) target = $region145
    $region144: #{forward.1} parent=1 // pred_region
      %290 = dma.done [#allocation20], 32
    $region145: #{forward.1} parent=1 // pred_fallthru
      _
    // Predicated region
    $region146: #{forward.1} parent=1 // pred_check
      _
    $region147: #{forward.1} parent=1 // pred_check_branch
      %292 = sbr.rel (0) target = $region149
    $region148: #{forward.1} parent=1 // pred_region
      %294 = dma.done [#allocation23], 512
    $region149: #{forward.1} parent=1 // pred_fallthru
      _
    // Predicated region
    $region150: #{forward.1} parent=1 // pred_check
      _
    $region151: #{forward.1} parent=1 // pred_check_branch
      %296 = sbr.rel (0) target = $region153
    $region152: #{forward.1} parent=1 // pred_region
      %298 = dma.done [#allocation23], 512
    $region153: #{forward.1} parent=1 // pred_fallthru
      _
    %v299 = vld [vmem:[%s0] sm:$0xff]
    %v300 = vld [vmem:[%s0 + $0x8] sm:$0xff]
    %v301 = vld [vmem:[%s0 + $0x10] sm:$0xff]
    %v302 = vld [vmem:[%s0 + $0x18] sm:$0xff]
    %v303 = vld [vmem:[#allocation2] sm:$0xff]
    %v304 = vld [vmem:[#allocation2 + $0x8] sm:$0xff]
    %v305 = vld [vmem:[#allocation2 + $0x10] sm:$0xff]
    %v306 = vld [vmem:[#allocation2 + $0x18] sm:$0xff]
    %v307 = vld [vmem:[%s2] sm:$0xff]
    %v308 = vld [vmem:[%s2 + $0x8] sm:$0xff]
    %v309 = vld [vmem:[%s2 + $0x10] sm:$0xff]
    %v310 = vld [vmem:[%s2 + $0x18] sm:$0xff]
    %v311 = vld [vmem:[%s2 + $0x20] sm:$0xff]
    %v312 = vld [vmem:[%s2 + $0x28] sm:$0xff]
    %v313 = vld [vmem:[%s2 + $0x30] sm:$0xff]
    %v314 = vld [vmem:[%s2 + $0x38] sm:$0xff]
    %v315 = vld [vmem:[%s2 + $0x40] sm:$0xff]
    %v316 = vld [vmem:[%s2 + $0x48] sm:$0xff]
    %v317 = vld [vmem:[%s2 + $0x50] sm:$0xff]
    %v318 = vld [vmem:[%s2 + $0x58] sm:$0xff]
    %v319 = vld [vmem:[%s2 + $0x60] sm:$0xff]
    %v320 = vld [vmem:[%s2 + $0x68] sm:$0xff]
    %v321 = vld [vmem:[%s2 + $0x70] sm:$0xff]
    %v322 = vld [vmem:[%s2 + $0x78] sm:$0xff]
    %323 = vmatpush.msra.mxu0 %v322
    %324 = vmatpush.msra.mxu0 %v321
    %325 = vmatpush.msra.mxu0 %v320
    %326 = vmatpush.msra.mxu0 %v319
    %327 = vmatpush.msra.mxu0 %v318
    %328 = vmatpush.msra.mxu0 %v317
    %329 = vmatpush.msra.mxu0 %v316
    %330 = vmatpush.msra.mxu0 %v315
    %331 = vmatpush.msra.mxu0 %v314
    %332 = vmatpush.msra.mxu0 %v313
    %333 = vmatpush.msra.mxu0 %v312
    %334 = vmatpush.msra.mxu0 %v311
    %335 = vmatpush.msra.mxu0 %v310
    %336 = vmatpush.msra.mxu0 %v309
    %337 = vmatpush.msra.mxu0 %v308
    %338 = vmatpush.msra.mxu0 %v307
    %339 = vmatmul.f32.gmra.mxu0 %v299
    %v340 = vpop.f32.mrf.mxu0
    %v341 = vadd.f32 0.0, %v340
    %342 = vmatmul.f32.gmra.mxu0 %v300
    %v343 = vpop.f32.mrf.mxu0
    %v344 = vadd.f32 0.0, %v343
    %345 = vmatmul.f32.gmra.mxu0 %v301
    %v346 = vpop.f32.mrf.mxu0
    %v347 = vadd.f32 0.0, %v346
    %348 = vmatmul.f32.gmra.mxu0 %v302
    %v349 = vpop.f32.mrf.mxu0
    %v350 = vadd.f32 0.0, %v349
    %351 = vdwg.mxu0
    %s352 = scalar_lea.vmem [#allocation2], 32
    %v353 = vld [vmem:[%s352] sm:$0xff]
    %v354 = vld [vmem:[%s352 + $0x8] sm:$0xff]
    %v355 = vld [vmem:[%s352 + $0x10] sm:$0xff]
    %v356 = vld [vmem:[%s352 + $0x18] sm:$0xff]
    %s357 = scalar_lea.vmem %s2, 128
    %v358 = vld [vmem:[%s357] sm:$0xff]
    %v359 = vld [vmem:[%s357 + $0x8] sm:$0xff]
    %v360 = vld [vmem:[%s357 + $0x10] sm:$0xff]
    %v361 = vld [vmem:[%s357 + $0x18] sm:$0xff]
    %v362 = vld [vmem:[%s357 + $0x20] sm:$0xff]
    %v363 = vld [vmem:[%s357 + $0x28] sm:$0xff]
    %v364 = vld [vmem:[%s357 + $0x30] sm:$0xff]
    %v365 = vld [vmem:[%s357 + $0x38] sm:$0xff]
    %v366 = vld [vmem:[%s357 + $0x40] sm:$0xff]
    %v367 = vld [vmem:[%s357 + $0x48] sm:$0xff]
    %v368 = vld [vmem:[%s357 + $0x50] sm:$0xff]
    %v369 = vld [vmem:[%s357 + $0x58] sm:$0xff]
    %v370 = vld [vmem:[%s357 + $0x60] sm:$0xff]
    %v371 = vld [vmem:[%s357 + $0x68] sm:$0xff]
    %v372 = vld [vmem:[%s357 + $0x70] sm:$0xff]
    %v373 = vld [vmem:[%s357 + $0x78] sm:$0xff]
    %374 = vmatpush.msra.mxu0 %v373
    %375 = vmatpush.msra.mxu0 %v372
    %376 = vmatpush.msra.mxu0 %v371
    %377 = vmatpush.msra.mxu0 %v370
    %378 = vmatpush.msra.mxu0 %v369
    %379 = vmatpush.msra.mxu0 %v368
    %380 = vmatpush.msra.mxu0 %v367
    %381 = vmatpush.msra.mxu0 %v366
    %382 = vmatpush.msra.mxu0 %v365
    %383 = vmatpush.msra.mxu0 %v364
    %384 = vmatpush.msra.mxu0 %v363
    %385 = vmatpush.msra.mxu0 %v362
    %386 = vmatpush.msra.mxu0 %v361
    %387 = vmatpush.msra.mxu0 %v360
    %388 = vmatpush.msra.mxu0 %v359
    %389 = vmatpush.msra.mxu0 %v358
    %390 = vmatmul.f32.gmra.mxu0 %v299
    %v391 = vpop.f32.mrf.mxu0
    %v392 = vadd.f32 0.0, %v391
    %393 = vmatmul.f32.gmra.mxu0 %v300
    %v394 = vpop.f32.mrf.mxu0
    %v395 = vadd.f32 0.0, %v394
    %396 = vmatmul.f32.gmra.mxu0 %v301
    %v397 = vpop.f32.mrf.mxu0
    %v398 = vadd.f32 0.0, %v397
    %399 = vmatmul.f32.gmra.mxu0 %v302
    %v400 = vpop.f32.mrf.mxu0
    %v401 = vadd.f32 0.0, %v400
    %402 = vdwg.mxu0
    %vm403 = vcmask 261120
    %v405 = vsel %vm403, %v353, 0
    %v408 = vsel %vm403, %v354, 0
    %v411 = vsel %vm403, %v355, 0
    %v414 = vsel %vm403, %v356, 0
    %416 = vmatpush.msra.mxu0 0.0
    %417 = vmatpush.msra.mxu0 0.0
    %418 = vmatpush.msra.mxu0 0.0
    %419 = vmatpush.msra.mxu0 0.0
    %420 = vmatpush.msra.mxu0 0.0
    %421 = vmatpush.msra.mxu0 0.0
    %422 = vmatpush.msra.mxu0 0.0
    %423 = vmatpush.msra.mxu0 0.0
    %424 = vmatpush.msra.mxu0 0.0
    %425 = vmatpush.msra.mxu0 0.0
    %426 = vmatpush.msra.mxu0 0.0
    %427 = vmatpush.msra.mxu0 0.0
    %428 = vmatpush.msra.mxu0 %v401
    %429 = vmatpush.msra.mxu0 %v398
    %430 = vmatpush.msra.mxu0 %v395
    %431 = vmatpush.msra.mxu0 %v392
    %432 = vmatmul.f32.gmra.mxu0 %v405
    %v433 = vpop.f32.mrf.mxu0
    %v434 = vadd.f32 0.0, %v433
    %435 = vmatmul.f32.gmra.mxu0 %v408
    %v436 = vpop.f32.mrf.mxu0
    %v437 = vadd.f32 0.0, %v436
    %438 = vmatmul.f32.gmra.mxu0 %v411
    %v439 = vpop.f32.mrf.mxu0
    %v440 = vadd.f32 0.0, %v439
    %441 = vmatmul.f32.gmra.mxu0 %v414
    %v442 = vpop.f32.mrf.mxu0
    %v443 = vadd.f32 0.0, %v442
    %444 = vdwg.mxu0
    %v446 = vsel %vm403, %v303, 0
    %v449 = vsel %vm403, %v304, 0
    %v452 = vsel %vm403, %v305, 0
    %v455 = vsel %vm403, %v306, 0
    %457 = vmatpush.msra.mxu0 0.0
    %458 = vmatpush.msra.mxu0 0.0
    %459 = vmatpush.msra.mxu0 0.0
    %460 = vmatpush.msra.mxu0 0.0
    %461 = vmatpush.msra.mxu0 0.0
    %462 = vmatpush.msra.mxu0 0.0
    %463 = vmatpush.msra.mxu0 0.0
    %464 = vmatpush.msra.mxu0 0.0
    %465 = vmatpush.msra.mxu0 0.0
    %466 = vmatpush.msra.mxu0 0.0
    %467 = vmatpush.msra.mxu0 0.0
    %468 = vmatpush.msra.mxu0 0.0
    %469 = vmatpush.msra.mxu0 %v350
    %470 = vmatpush.msra.mxu0 %v347
    %471 = vmatpush.msra.mxu0 %v344
    %472 = vmatpush.msra.mxu0 %v341
    %473 = vmatmul.f32.gmra.mxu0 %v446
    %v474 = vpop.f32.mrf.mxu0
    %v475 = vadd.f32 %v434, %v474
    %476 = vmatmul.f32.gmra.mxu0 %v449
    %v477 = vpop.f32.mrf.mxu0
    %v478 = vadd.f32 %v437, %v477
    %479 = vmatmul.f32.gmra.mxu0 %v452
    %v480 = vpop.f32.mrf.mxu0
    %v481 = vadd.f32 %v440, %v480
    %482 = vmatmul.f32.gmra.mxu0 %v455
    %v483 = vpop.f32.mrf.mxu0
    %v484 = vadd.f32 %v443, %v483
    %485 = vdwg.mxu0
    %s486 = scalar_lea.vmem [#allocation2], 64
    %v487 = vld [vmem:[%s486] sm:$0xff]
    %v488 = vld [vmem:[%s486 + $0x8] sm:$0xff]
    %v489 = vld [vmem:[%s486 + $0x10] sm:$0xff]
    %v490 = vld [vmem:[%s486 + $0x18] sm:$0xff]
    %s491 = scalar_lea.vmem %s2, 256
    %v492 = vld [vmem:[%s491] sm:$0xff]
    %v493 = vld [vmem:[%s491 + $0x8] sm:$0xff]
    %v494 = vld [vmem:[%s491 + $0x10] sm:$0xff]
    %v495 = vld [vmem:[%s491 + $0x18] sm:$0xff]
    %v496 = vld [vmem:[%s491 + $0x20] sm:$0xff]
    %v497 = vld [vmem:[%s491 + $0x28] sm:$0xff]
    %v498 = vld [vmem:[%s491 + $0x30] sm:$0xff]
    %v499 = vld [vmem:[%s491 + $0x38] sm:$0xff]
    %v500 = vld [vmem:[%s491 + $0x40] sm:$0xff]
    %v501 = vld [vmem:[%s491 + $0x48] sm:$0xff]
    %v502 = vld [vmem:[%s491 + $0x50] sm:$0xff]
    %v503 = vld [vmem:[%s491 + $0x58] sm:$0xff]
    %v504 = vld [vmem:[%s491 + $0x60] sm:$0xff]
    %v505 = vld [vmem:[%s491 + $0x68] sm:$0xff]
    %v506 = vld [vmem:[%s491 + $0x70] sm:$0xff]
    %v507 = vld [vmem:[%s491 + $0x78] sm:$0xff]
    %508 = vmatpush.msra.mxu0 %v507
    %509 = vmatpush.msra.mxu0 %v506
    %510 = vmatpush.msra.mxu0 %v505
    %511 = vmatpush.msra.mxu0 %v504
    %512 = vmatpush.msra.mxu0 %v503
    %513 = vmatpush.msra.mxu0 %v502
    %514 = vmatpush.msra.mxu0 %v501
    %515 = vmatpush.msra.mxu0 %v500
    %516 = vmatpush.msra.mxu0 %v499
    %517 = vmatpush.msra.mxu0 %v498
    %518 = vmatpush.msra.mxu0 %v497
    %519 = vmatpush.msra.mxu0 %v496
    %520 = vmatpush.msra.mxu0 %v495
    %521 = vmatpush.msra.mxu0 %v494
    %522 = vmatpush.msra.mxu0 %v493
    %523 = vmatpush.msra.mxu0 %v492
    %524 = vmatmul.f32.gmra.mxu0 %v299
    %v525 = vpop.f32.mrf.mxu0
    %v526 = vadd.f32 0.0, %v525
    %527 = vmatmul.f32.gmra.mxu0 %v300
    %v528 = vpop.f32.mrf.mxu0
    %v529 = vadd.f32 0.0, %v528
    %530 = vmatmul.f32.gmra.mxu0 %v301
    %v531 = vpop.f32.mrf.mxu0
    %v532 = vadd.f32 0.0, %v531
    %533 = vmatmul.f32.gmra.mxu0 %v302
    %v534 = vpop.f32.mrf.mxu0
    %v535 = vadd.f32 0.0, %v534
    %536 = vdwg.mxu0
    %v538 = vsel %vm403, %v487, 0
    %v541 = vsel %vm403, %v488, 0
    %v544 = vsel %vm403, %v489, 0
    %v547 = vsel %vm403, %v490, 0
    %549 = vmatpush.msra.mxu0 0.0
    %550 = vmatpush.msra.mxu0 0.0
    %551 = vmatpush.msra.mxu0 0.0
    %552 = vmatpush.msra.mxu0 0.0
    %553 = vmatpush.msra.mxu0 0.0
    %554 = vmatpush.msra.mxu0 0.0
    %555 = vmatpush.msra.mxu0 0.0
    %556 = vmatpush.msra.mxu0 0.0
    %557 = vmatpush.msra.mxu0 0.0
    %558 = vmatpush.msra.mxu0 0.0
    %559 = vmatpush.msra.mxu0 0.0
    %560 = vmatpush.msra.mxu0 0.0
    %561 = vmatpush.msra.mxu0 %v535
    %562 = vmatpush.msra.mxu0 %v532
    %563 = vmatpush.msra.mxu0 %v529
    %564 = vmatpush.msra.mxu0 %v526
    %565 = vmatmul.f32.gmra.mxu0 %v538
    %v566 = vpop.f32.mrf.mxu0
    %v567 = vadd.f32 0.0, %v566
    %568 = vmatmul.f32.gmra.mxu0 %v541
    %v569 = vpop.f32.mrf.mxu0
    %v570 = vadd.f32 0.0, %v569
    %571 = vmatmul.f32.gmra.mxu0 %v544
    %v572 = vpop.f32.mrf.mxu0
    %v573 = vadd.f32 0.0, %v572
    %574 = vmatmul.f32.gmra.mxu0 %v547
    %v575 = vpop.f32.mrf.mxu0
    %v576 = vadd.f32 0.0, %v575
    %577 = vdwg.mxu0
    %v578 = vadd.f32 %v475, %v567
    %v579 = vadd.f32 %v478, %v570
    %v580 = vadd.f32 %v481, %v573
    %v581 = vadd.f32 %v484, %v576
    %v582 = vld [vmem:[%s3] sm:$0x1]
    %v584 = vperm.slane %v582, 0
    %v586 = vadd.f32 %v578, %v584
    %v587 = vadd.f32 %v579, %v584
    %v588 = vadd.f32 %v580, %v584
    %v589 = vadd.f32 %v581, %v584
    %vm590 = vcmp.gt.f32.partialorder %v586, 0.0
    %vm591 = vcmp.gt.f32.partialorder %v587, 0.0
    %vm592 = vcmp.gt.f32.partialorder %v588, 0.0
    %vm593 = vcmp.gt.f32.partialorder %v589, 0.0
    %v594 = vmul.f32 %v586, 0.1
    %v595 = vmul.f32 %v587, 0.1
    %v596 = vmul.f32 %v588, 0.1
    %v597 = vmul.f32 %v589, 0.1
    %v598 = vsel %vm590, %v586, %v594
    %v599 = vsel %vm591, %v587, %v595
    %v600 = vsel %vm592, %v588, %v596
    %v601 = vsel %vm593, %v589, %v597
    %v602 = vld [vmem:[#allocation4] sm:$0xff]
    %v603 = vld [vmem:[#allocation4 + $0x8] sm:$0xff]
    %v604 = vld [vmem:[#allocation6] sm:$0xff]
    %v605 = vld [vmem:[#allocation6 + $0x8] sm:$0xff]
    %v606 = vld [vmem:[#allocation6 + $0x10] sm:$0xff]
    %v607 = vld [vmem:[#allocation6 + $0x18] sm:$0xff]
    %v608 = vld [vmem:[#allocation6 + $0x20] sm:$0xff]
    %v609 = vld [vmem:[#allocation6 + $0x28] sm:$0xff]
    %v610 = vld [vmem:[#allocation6 + $0x30] sm:$0xff]
    %v611 = vld [vmem:[#allocation6 + $0x38] sm:$0xff]
    %v612 = vld [vmem:[#allocation6 + $0x40] sm:$0xff]
    %v613 = vld [vmem:[#allocation6 + $0x48] sm:$0xff]
    %v614 = vld [vmem:[#allocation6 + $0x50] sm:$0xff]
    %v615 = vld [vmem:[#allocation6 + $0x58] sm:$0xff]
    %v616 = vld [vmem:[#allocation6 + $0x60] sm:$0xff]
    %v617 = vld [vmem:[#allocation6 + $0x68] sm:$0xff]
    %v618 = vld [vmem:[#allocation6 + $0x70] sm:$0xff]
    %v619 = vld [vmem:[#allocation6 + $0x78] sm:$0xff]
    %620 = vmatpush.msra.mxu0 %v619
    %621 = vmatpush.msra.mxu0 %v618
    %622 = vmatpush.msra.mxu0 %v617
    %623 = vmatpush.msra.mxu0 %v616
    %624 = vmatpush.msra.mxu0 %v615
    %625 = vmatpush.msra.mxu0 %v614
    %626 = vmatpush.msra.mxu0 %v613
    %627 = vmatpush.msra.mxu0 %v612
    %628 = vmatpush.msra.mxu0 %v611
    %629 = vmatpush.msra.mxu0 %v610
    %630 = vmatpush.msra.mxu0 %v609
    %631 = vmatpush.msra.mxu0 %v608
    %632 = vmatpush.msra.mxu0 %v607
    %633 = vmatpush.msra.mxu0 %v606
    %634 = vmatpush.msra.mxu0 %v605
    %635 = vmatpush.msra.mxu0 %v604
    %636 = vmatmul.f32.gmra.mxu0 %v598
    %v637 = vpop.f32.mrf.mxu0
    %v638 = vadd.f32 0.0, %v637
    %639 = vmatmul.f32.gmra.mxu0 %v599
    %v640 = vpop.f32.mrf.mxu0
    %v641 = vadd.f32 0.0, %v640
    %642 = vmatmul.f32.gmra.mxu0 %v600
    %v643 = vpop.f32.mrf.mxu0
    %v644 = vadd.f32 0.0, %v643
    %645 = vmatmul.f32.gmra.mxu0 %v601
    %v646 = vpop.f32.mrf.mxu0
    %v647 = vadd.f32 0.0, %v646
    %648 = vdwg.mxu0
    %s649 = scalar_lea.vmem [#allocation4], 16
    %v650 = vld [vmem:[%s649] sm:$0xff]
    %v651 = vld [vmem:[%s649 + $0x8] sm:$0xff]
    %s652 = scalar_lea.vmem [#allocation6], 128
    %v653 = vld [vmem:[%s652] sm:$0xff]
    %v654 = vld [vmem:[%s652 + $0x8] sm:$0xff]
    %v655 = vld [vmem:[%s652 + $0x10] sm:$0xff]
    %v656 = vld [vmem:[%s652 + $0x18] sm:$0xff]
    %v657 = vld [vmem:[%s652 + $0x20] sm:$0xff]
    %v658 = vld [vmem:[%s652 + $0x28] sm:$0xff]
    %v659 = vld [vmem:[%s652 + $0x30] sm:$0xff]
    %v660 = vld [vmem:[%s652 + $0x38] sm:$0xff]
    %v661 = vld [vmem:[%s652 + $0x40] sm:$0xff]
    %v662 = vld [vmem:[%s652 + $0x48] sm:$0xff]
    %v663 = vld [vmem:[%s652 + $0x50] sm:$0xff]
    %v664 = vld [vmem:[%s652 + $0x58] sm:$0xff]
    %v665 = vld [vmem:[%s652 + $0x60] sm:$0xff]
    %v666 = vld [vmem:[%s652 + $0x68] sm:$0xff]
    %v667 = vld [vmem:[%s652 + $0x70] sm:$0xff]
    %v668 = vld [vmem:[%s652 + $0x78] sm:$0xff]
    %669 = vmatpush.msra.mxu0 %v668
    %670 = vmatpush.msra.mxu0 %v667
    %671 = vmatpush.msra.mxu0 %v666
    %672 = vmatpush.msra.mxu0 %v665
    %673 = vmatpush.msra.mxu0 %v664
    %674 = vmatpush.msra.mxu0 %v663
    %675 = vmatpush.msra.mxu0 %v662
    %676 = vmatpush.msra.mxu0 %v661
    %677 = vmatpush.msra.mxu0 %v660
    %678 = vmatpush.msra.mxu0 %v659
    %679 = vmatpush.msra.mxu0 %v658
    %680 = vmatpush.msra.mxu0 %v657
    %681 = vmatpush.msra.mxu0 %v656
    %682 = vmatpush.msra.mxu0 %v655
    %683 = vmatpush.msra.mxu0 %v654
    %684 = vmatpush.msra.mxu0 %v653
    %685 = vmatmul.f32.gmra.mxu0 %v598
    %v686 = vpop.f32.mrf.mxu0
    %v687 = vadd.f32 0.0, %v686
    %688 = vmatmul.f32.gmra.mxu0 %v599
    %v689 = vpop.f32.mrf.mxu0
    %v690 = vadd.f32 0.0, %v689
    %691 = vmatmul.f32.gmra.mxu0 %v600
    %v692 = vpop.f32.mrf.mxu0
    %v693 = vadd.f32 0.0, %v692
    %694 = vmatmul.f32.gmra.mxu0 %v601
    %v695 = vpop.f32.mrf.mxu0
    %v696 = vadd.f32 0.0, %v695
    %697 = vdwg.mxu0
    %v699 = vsel %vm403, %v650, 0
    %v702 = vsel %vm403, %v651, 0
    %704 = vmatpush.msra.mxu0 0.0
    %705 = vmatpush.msra.mxu0 0.0
    %706 = vmatpush.msra.mxu0 0.0
    %707 = vmatpush.msra.mxu0 0.0
    %708 = vmatpush.msra.mxu0 0.0
    %709 = vmatpush.msra.mxu0 0.0
    %710 = vmatpush.msra.mxu0 0.0
    %711 = vmatpush.msra.mxu0 0.0
    %712 = vmatpush.msra.mxu0 0.0
    %713 = vmatpush.msra.mxu0 0.0
    %714 = vmatpush.msra.mxu0 0.0
    %715 = vmatpush.msra.mxu0 0.0
    %716 = vmatpush.msra.mxu0 %v696
    %717 = vmatpush.msra.mxu0 %v693
    %718 = vmatpush.msra.mxu0 %v690
    %719 = vmatpush.msra.mxu0 %v687
    %720 = vmatmul.f32.gmra.mxu0 %v699
    %v721 = vpop.f32.mrf.mxu0
    %v722 = vadd.f32 0.0, %v721
    %723 = vmatmul.f32.gmra.mxu0 %v702
    %v724 = vpop.f32.mrf.mxu0
    %v725 = vadd.f32 0.0, %v724
    %726 = vdwg.mxu0
    %v728 = vsel %vm403, %v602, 0
    %v731 = vsel %vm403, %v603, 0
    %733 = vmatpush.msra.mxu0 0.0
    %734 = vmatpush.msra.mxu0 0.0
    %735 = vmatpush.msra.mxu0 0.0
    %736 = vmatpush.msra.mxu0 0.0
    %737 = vmatpush.msra.mxu0 0.0
    %738 = vmatpush.msra.mxu0 0.0
    %739 = vmatpush.msra.mxu0 0.0
    %740 = vmatpush.msra.mxu0 0.0
    %741 = vmatpush.msra.mxu0 0.0
    %742 = vmatpush.msra.mxu0 0.0
    %743 = vmatpush.msra.mxu0 0.0
    %744 = vmatpush.msra.mxu0 0.0
    %745 = vmatpush.msra.mxu0 %v647
    %746 = vmatpush.msra.mxu0 %v644
    %747 = vmatpush.msra.mxu0 %v641
    %748 = vmatpush.msra.mxu0 %v638
    %749 = vmatmul.f32.gmra.mxu0 %v728
    %v750 = vpop.f32.mrf.mxu0
    %v751 = vadd.f32 %v722, %v750
    %752 = vmatmul.f32.gmra.mxu0 %v731
    %v753 = vpop.f32.mrf.mxu0
    %v754 = vadd.f32 %v725, %v753
    %755 = vdwg.mxu0
    %s756 = scalar_lea.vmem [#allocation4], 32
    %v757 = vld [vmem:[%s756] sm:$0xff]
    %v758 = vld [vmem:[%s756 + $0x8] sm:$0xff]
    %s759 = scalar_lea.vmem [#allocation6], 256
    %v760 = vld [vmem:[%s759] sm:$0xff]
    %v761 = vld [vmem:[%s759 + $0x8] sm:$0xff]
    %v762 = vld [vmem:[%s759 + $0x10] sm:$0xff]
    %v763 = vld [vmem:[%s759 + $0x18] sm:$0xff]
    %v764 = vld [vmem:[%s759 + $0x20] sm:$0xff]
    %v765 = vld [vmem:[%s759 + $0x28] sm:$0xff]
    %v766 = vld [vmem:[%s759 + $0x30] sm:$0xff]
    %v767 = vld [vmem:[%s759 + $0x38] sm:$0xff]
    %v768 = vld [vmem:[%s759 + $0x40] sm:$0xff]
    %v769 = vld [vmem:[%s759 + $0x48] sm:$0xff]
    %v770 = vld [vmem:[%s759 + $0x50] sm:$0xff]
    %v771 = vld [vmem:[%s759 + $0x58] sm:$0xff]
    %v772 = vld [vmem:[%s759 + $0x60] sm:$0xff]
    %v773 = vld [vmem:[%s759 + $0x68] sm:$0xff]
    %v774 = vld [vmem:[%s759 + $0x70] sm:$0xff]
    %v775 = vld [vmem:[%s759 + $0x78] sm:$0xff]
    %776 = vmatpush.msra.mxu0 %v775
    %777 = vmatpush.msra.mxu0 %v774
    %778 = vmatpush.msra.mxu0 %v773
    %779 = vmatpush.msra.mxu0 %v772
    %780 = vmatpush.msra.mxu0 %v771
    %781 = vmatpush.msra.mxu0 %v770
    %782 = vmatpush.msra.mxu0 %v769
    %783 = vmatpush.msra.mxu0 %v768
    %784 = vmatpush.msra.mxu0 %v767
    %785 = vmatpush.msra.mxu0 %v766
    %786 = vmatpush.msra.mxu0 %v765
    %787 = vmatpush.msra.mxu0 %v764
    %788 = vmatpush.msra.mxu0 %v763
    %789 = vmatpush.msra.mxu0 %v762
    %790 = vmatpush.msra.mxu0 %v761
    %791 = vmatpush.msra.mxu0 %v760
    %792 = vmatmul.f32.gmra.mxu0 %v598
    %v793 = vpop.f32.mrf.mxu0
    %v794 = vadd.f32 0.0, %v793
    %795 = vmatmul.f32.gmra.mxu0 %v599
    %v796 = vpop.f32.mrf.mxu0
    %v797 = vadd.f32 0.0, %v796
    %798 = vmatmul.f32.gmra.mxu0 %v600
    %v799 = vpop.f32.mrf.mxu0
    %v800 = vadd.f32 0.0, %v799
    %801 = vmatmul.f32.gmra.mxu0 %v601
    %v802 = vpop.f32.mrf.mxu0
    %v803 = vadd.f32 0.0, %v802
    %804 = vdwg.mxu0
    %v806 = vsel %vm403, %v757, 0
    %v809 = vsel %vm403, %v758, 0
    %811 = vmatpush.msra.mxu0 0.0
    %812 = vmatpush.msra.mxu0 0.0
    %813 = vmatpush.msra.mxu0 0.0
    %814 = vmatpush.msra.mxu0 0.0
    %815 = vmatpush.msra.mxu0 0.0
    %816 = vmatpush.msra.mxu0 0.0
    %817 = vmatpush.msra.mxu0 0.0
    %818 = vmatpush.msra.mxu0 0.0
    %819 = vmatpush.msra.mxu0 0.0
    %820 = vmatpush.msra.mxu0 0.0
    %821 = vmatpush.msra.mxu0 0.0
    %822 = vmatpush.msra.mxu0 0.0
    %823 = vmatpush.msra.mxu0 %v803
    %824 = vmatpush.msra.mxu0 %v800
    %825 = vmatpush.msra.mxu0 %v797
    %826 = vmatpush.msra.mxu0 %v794
    %827 = vmatmul.f32.gmra.mxu0 %v806
    %v828 = vpop.f32.mrf.mxu0
    %v829 = vadd.f32 0.0, %v828
    %830 = vmatmul.f32.gmra.mxu0 %v809
    %v831 = vpop.f32.mrf.mxu0
    %v832 = vadd.f32 0.0, %v831
    %833 = vdwg.mxu0
    %v834 = vadd.f32 %v751, %v829
    %v835 = vadd.f32 %v754, %v832
    %v836 = vld [vmem:[%s6] sm:$0x1]
    %v838 = vperm.slane %v836, 0
    %v840 = vadd.f32 %v834, %v838
    %v841 = vadd.f32 %v835, %v838
    %vm842 = vcmp.gt.f32.partialorder %v840, 0.0
    %vm843 = vcmp.gt.f32.partialorder %v841, 0.0
    %v844 = vmul.f32 %v840, 0.1
    %v845 = vmul.f32 %v841, 0.1
    %v846 = vsel %vm842, %v840, %v844
    %v847 = vsel %vm843, %v841, %v845
    %v848 = vld [vmem:[#allocation7] sm:$0xff]
    %v849 = vld [vmem:[#allocation7 + $0x8] sm:$0xff]
    %v850 = vld [vmem:[#allocation7 + $0x10] sm:$0xff]
    %v851 = vld [vmem:[#allocation7 + $0x18] sm:$0xff]
    %v852 = vld [vmem:[#allocation7 + $0x20] sm:$0xff]
    %v853 = vld [vmem:[#allocation7 + $0x28] sm:$0xff]
    %v854 = vld [vmem:[#allocation7 + $0x30] sm:$0xff]
    %v855 = vld [vmem:[#allocation7 + $0x38] sm:$0xff]
    %v856 = vld [vmem:[#allocation7 + $0x40] sm:$0xff]
    %v857 = vld [vmem:[#allocation7 + $0x48] sm:$0xff]
    %v858 = vld [vmem:[#allocation7 + $0x50] sm:$0xff]
    %v859 = vld [vmem:[#allocation7 + $0x58] sm:$0xff]
    %v860 = vld [vmem:[#allocation7 + $0x60] sm:$0xff]
    %v861 = vld [vmem:[#allocation7 + $0x68] sm:$0xff]
    %v862 = vld [vmem:[#allocation7 + $0x70] sm:$0xff]
    %v863 = vld [vmem:[#allocation7 + $0x78] sm:$0xff]
    %v864 = vld [vmem:[%s8] sm:$0x1]
    %v866 = vperm.slane %v864, 0
    %868 = vmatpush.msra.mxu0 %v863
    %869 = vmatpush.msra.mxu0 %v862
    %870 = vmatpush.msra.mxu0 %v861
    %871 = vmatpush.msra.mxu0 %v860
    %872 = vmatpush.msra.mxu0 %v859
    %873 = vmatpush.msra.mxu0 %v858
    %874 = vmatpush.msra.mxu0 %v857
    %875 = vmatpush.msra.mxu0 %v856
    %876 = vmatpush.msra.mxu0 %v855
    %877 = vmatpush.msra.mxu0 %v854
    %878 = vmatpush.msra.mxu0 %v853
    %879 = vmatpush.msra.mxu0 %v852
    %880 = vmatpush.msra.mxu0 %v851
    %881 = vmatpush.msra.mxu0 %v850
    %882 = vmatpush.msra.mxu0 %v849
    %883 = vmatpush.msra.mxu0 %v848
    %884 = vmatmul.f32.gmra.mxu0 %v846
    %v885 = vpop.f32.mrf.mxu0
    %v886 = vadd.f32 %v866, %v885
    %887 = vmatmul.f32.gmra.mxu0 %v847
    %v888 = vpop.f32.mrf.mxu0
    %v889 = vadd.f32 %v866, %v888
    %890 = vdwg.mxu0
    %v891 = vmax.f32 %v886, 0.0
    %v892 = vmax.f32 %v889, 0.0
    %vm893 = vcmp.ne.f32.partialorder %v886, %v886
    %vm894 = vcmp.ne.f32.partialorder %v889, %v889
    %v895 = vadd.f32 %v886, 0.0
    %v896 = vadd.f32 %v889, 0.0
    %v897 = vand.u32 2147483647, %v886
    %v898 = vand.u32 2147483647, %v889
    %v899 = vsub.f32 0.0, %v897
    %v900 = vsub.f32 0.0, %v898
    %v901 = vmul.f32 %v899, 1.442695
    %v902 = vpow.pop %v901
    %v903 = vmul.f32 %v900, 1.442695
    %v904 = vpow.pop %v903
    %v905 = vadd.f32 %v902, 1.0
    %v906 = vlog2.pop %v905
    %v907 = vmul.f32 %v906, 0.6931472
    %v908 = vmul.f32 -0.5, %v902
    %v909 = vadd.f32 %v908, 1.0
    %v910 = vmul.f32 %v909, %v902
    %v911 = vand.u32 2147483647, %v902
    %vm912 = vcmp.lt.f32.partialorder %v911, 0.0004427343
    %v913 = vsel %vm912, %v910, %v907
    %v914 = vadd.f32 %v904, 1.0
    %v915 = vlog2.pop %v914
    %v916 = vmul.f32 %v915, 0.6931472
    %v917 = vmul.f32 -0.5, %v904
    %v918 = vadd.f32 %v917, 1.0
    %v919 = vmul.f32 %v918, %v904
    %v920 = vand.u32 2147483647, %v904
    %vm921 = vcmp.lt.f32.partialorder %v920, 0.0004427343
    %v922 = vsel %vm921, %v919, %v916
    %v923 = vadd.f32 %v891, %v913
    %v924 = vadd.f32 %v892, %v922
    %v925 = vsel %vm893, %v895, %v923
    %v926 = vsel %vm894, %v896, %v924
    %v927 = vtanh.pop %v925
    %v928 = vtanh.pop %v926
    %v929 = vmul.f32 %v886, %v927
    %v930 = vmul.f32 %v889, %v928
    %v931 = vadd.f32 %v929, %v846
    %v932 = vadd.f32 %v930, %v847
    %v933 = vld [vmem:[#allocation9] sm:$0xff]
    %vm934 = vcmask 130048
    %v936 = vsel %vm934, %v933, 0
    %938 = vmatpush.msra.mxu0 0.0
    %939 = vmatpush.msra.mxu0 0.0
    %940 = vmatpush.msra.mxu0 0.0
    %941 = vmatpush.msra.mxu0 0.0
    %942 = vmatpush.msra.mxu0 0.0
    %943 = vmatpush.msra.mxu0 0.0
    %944 = vmatpush.msra.mxu0 0.0
    %945 = vmatpush.msra.mxu0 0.0
    %946 = vmatpush.msra.mxu0 0.0
    %947 = vmatpush.msra.mxu0 0.0
    %948 = vmatpush.msra.mxu0 0.0
    %949 = vmatpush.msra.mxu0 0.0
    %950 = vmatpush.msra.mxu0 0.0
    %951 = vmatpush.msra.mxu0 0.0
    %952 = vmatpush.msra.mxu0 %v932
    %953 = vmatpush.msra.mxu0 %v931
    %954 = vmatmul.f32.gmra.mxu0 %v936
    %v955 = vpop.f32.mrf.mxu0
    %v956 = vadd.f32 0.0, %v955
    %957 = vdwg.mxu0
    %s958 = scalar_lea.vmem [#allocation9], 8
    %v959 = vld [vmem:[%s958] sm:$0xff]
    %v961 = vsel %vm934, %v959, 0
    %963 = vmatpush.msra.mxu0 0.0
    %964 = vmatpush.msra.mxu0 0.0
    %965 = vmatpush.msra.mxu0 0.0
    %966 = vmatpush.msra.mxu0 0.0
    %967 = vmatpush.msra.mxu0 0.0
    %968 = vmatpush.msra.mxu0 0.0
    %969 = vmatpush.msra.mxu0 0.0
    %970 = vmatpush.msra.mxu0 0.0
    %971 = vmatpush.msra.mxu0 0.0
    %972 = vmatpush.msra.mxu0 0.0
    %973 = vmatpush.msra.mxu0 0.0
    %974 = vmatpush.msra.mxu0 0.0
    %975 = vmatpush.msra.mxu0 0.0
    %976 = vmatpush.msra.mxu0 0.0
    %977 = vmatpush.msra.mxu0 %v932
    %978 = vmatpush.msra.mxu0 %v931
    %979 = vmatmul.f32.gmra.mxu0 %v961
    %v980 = vpop.f32.mrf.mxu0
    %v981 = vadd.f32 0.0, %v980
    %982 = vdwg.mxu0
    %v983 = vld [vmem:[%s10] sm:$0xff]
    %v984 = vld [vmem:[%s10 + $0x8] sm:$0xff]
    %v985 = vld [vmem:[%s10 + $0x10] sm:$0xff]
    %v986 = vld [vmem:[%s10 + $0x18] sm:$0xff]
    %v987 = vld [vmem:[%s10 + $0x20] sm:$0xff]
    %v988 = vld [vmem:[%s10 + $0x28] sm:$0xff]
    %v989 = vld [vmem:[%s10 + $0x30] sm:$0xff]
    %v990 = vld [vmem:[%s10 + $0x38] sm:$0xff]
    %v991 = vld [vmem:[%s10 + $0x40] sm:$0xff]
    %v992 = vld [vmem:[%s10 + $0x48] sm:$0xff]
    %v993 = vld [vmem:[%s10 + $0x50] sm:$0xff]
    %v994 = vld [vmem:[%s10 + $0x58] sm:$0xff]
    %v995 = vld [vmem:[%s10 + $0x60] sm:$0xff]
    %v996 = vld [vmem:[%s10 + $0x68] sm:$0xff]
    %v997 = vld [vmem:[%s10 + $0x70] sm:$0xff]
    %v998 = vld [vmem:[%s10 + $0x78] sm:$0xff]
    %999 = vmatpush.msra.mxu0 %v998
    %1000 = vmatpush.msra.mxu0 %v997
    %1001 = vmatpush.msra.mxu0 %v996
    %1002 = vmatpush.msra.mxu0 %v995
    %1003 = vmatpush.msra.mxu0 %v994
    %1004 = vmatpush.msra.mxu0 %v993
    %1005 = vmatpush.msra.mxu0 %v992
    %1006 = vmatpush.msra.mxu0 %v991
    %1007 = vmatpush.msra.mxu0 %v990
    %1008 = vmatpush.msra.mxu0 %v989
    %1009 = vmatpush.msra.mxu0 %v988
    %1010 = vmatpush.msra.mxu0 %v987
    %1011 = vmatpush.msra.mxu0 %v986
    %1012 = vmatpush.msra.mxu0 %v985
    %1013 = vmatpush.msra.mxu0 %v984
    %1014 = vmatpush.msra.mxu0 %v983
    %1015 = vmatmul.f32.gmra.mxu0 %v956
    %v1016 = vpop.f32.mrf.mxu0
    %v1017 = vadd.f32 0.0, %v1016
    %1018 = vdwg.mxu0
    %s1019 = scalar_lea.vmem %s10, 128
    %v1020 = vld [vmem:[%s1019] sm:$0xff]
    %v1021 = vld [vmem:[%s1019 + $0x8] sm:$0xff]
    %v1022 = vld [vmem:[%s1019 + $0x10] sm:$0xff]
    %v1023 = vld [vmem:[%s1019 + $0x18] sm:$0xff]
    %v1024 = vld [vmem:[%s1019 + $0x20] sm:$0xff]
    %v1025 = vld [vmem:[%s1019 + $0x28] sm:$0xff]
    %v1026 = vld [vmem:[%s1019 + $0x30] sm:$0xff]
    %v1027 = vld [vmem:[%s1019 + $0x38] sm:$0xff]
    %v1028 = vld [vmem:[%s1019 + $0x40] sm:$0xff]
    %v1029 = vld [vmem:[%s1019 + $0x48] sm:$0xff]
    %v1030 = vld [vmem:[%s1019 + $0x50] sm:$0xff]
    %v1031 = vld [vmem:[%s1019 + $0x58] sm:$0xff]
    %v1032 = vld [vmem:[%s1019 + $0x60] sm:$0xff]
    %v1033 = vld [vmem:[%s1019 + $0x68] sm:$0xff]
    %v1034 = vld [vmem:[%s1019 + $0x70] sm:$0xff]
    %v1035 = vld [vmem:[%s1019 + $0x78] sm:$0xff]
    %1036 = vmatpush.msra.mxu0 %v1035
    %1037 = vmatpush.msra.mxu0 %v1034
    %1038 = vmatpush.msra.mxu0 %v1033
    %1039 = vmatpush.msra.mxu0 %v1032
    %1040 = vmatpush.msra.mxu0 %v1031
    %1041 = vmatpush.msra.mxu0 %v1030
    %1042 = vmatpush.msra.mxu0 %v1029
    %1043 = vmatpush.msra.mxu0 %v1028
    %1044 = vmatpush.msra.mxu0 %v1027
    %1045 = vmatpush.msra.mxu0 %v1026
    %1046 = vmatpush.msra.mxu0 %v1025
    %1047 = vmatpush.msra.mxu0 %v1024
    %1048 = vmatpush.msra.mxu0 %v1023
    %1049 = vmatpush.msra.mxu0 %v1022
    %1050 = vmatpush.msra.mxu0 %v1021
    %1051 = vmatpush.msra.mxu0 %v1020
    %1052 = vmatmul.f32.gmra.mxu0 %v956
    %v1053 = vpop.f32.mrf.mxu0
    %v1054 = vadd.f32 0.0, %v1053
    %1055 = vdwg.mxu0
    %v1056 = vmax.f32 %v1017, %v1054
    %1057 = vmatpush.msra.mxu0 %v998
    %1058 = vmatpush.msra.mxu0 %v997
    %1059 = vmatpush.msra.mxu0 %v996
    %1060 = vmatpush.msra.mxu0 %v995
    %1061 = vmatpush.msra.mxu0 %v994
    %1062 = vmatpush.msra.mxu0 %v993
    %1063 = vmatpush.msra.mxu0 %v992
    %1064 = vmatpush.msra.mxu0 %v991
    %1065 = vmatpush.msra.mxu0 %v990
    %1066 = vmatpush.msra.mxu0 %v989
    %1067 = vmatpush.msra.mxu0 %v988
    %1068 = vmatpush.msra.mxu0 %v987
    %1069 = vmatpush.msra.mxu0 %v986
    %1070 = vmatpush.msra.mxu0 %v985
    %1071 = vmatpush.msra.mxu0 %v984
    %1072 = vmatpush.msra.mxu0 %v983
    %1073 = vmatmul.f32.gmra.mxu0 %v981
    %v1074 = vpop.f32.mrf.mxu0
    %v1075 = vadd.f32 0.0, %v1074
    %1076 = vdwg.mxu0
    %1077 = vmatpush.msra.mxu0 %v1035
    %1078 = vmatpush.msra.mxu0 %v1034
    %1079 = vmatpush.msra.mxu0 %v1033
    %1080 = vmatpush.msra.mxu0 %v1032
    %1081 = vmatpush.msra.mxu0 %v1031
    %1082 = vmatpush.msra.mxu0 %v1030
    %1083 = vmatpush.msra.mxu0 %v1029
    %1084 = vmatpush.msra.mxu0 %v1028
    %1085 = vmatpush.msra.mxu0 %v1027
    %1086 = vmatpush.msra.mxu0 %v1026
    %1087 = vmatpush.msra.mxu0 %v1025
    %1088 = vmatpush.msra.mxu0 %v1024
    %1089 = vmatpush.msra.mxu0 %v1023
    %1090 = vmatpush.msra.mxu0 %v1022
    %1091 = vmatpush.msra.mxu0 %v1021
    %1092 = vmatpush.msra.mxu0 %v1020
    %1093 = vmatmul.f32.gmra.mxu0 %v981
    %v1094 = vpop.f32.mrf.mxu0
    %v1095 = vadd.f32 0.0, %v1094
    %1096 = vdwg.mxu0
    %v1097 = vmax.f32 %v1075, %v1095
    %v1098 = vmax.f32 %v1056, %v1097
    %v1099 = vld [vmem:[#allocation10] sm:$0xff]
    %v1100 = vld [vmem:[#allocation10 + $0x8] sm:$0xff]
    %v1101 = vld [vmem:[#allocation10 + $0x10] sm:$0xff]
    %v1102 = vld [vmem:[#allocation10 + $0x18] sm:$0xff]
    %v1103 = vld [vmem:[#allocation10 + $0x20] sm:$0xff]
    %v1104 = vld [vmem:[#allocation10 + $0x28] sm:$0xff]
    %v1105 = vld [vmem:[#allocation10 + $0x30] sm:$0xff]
    %v1106 = vld [vmem:[#allocation10 + $0x38] sm:$0xff]
    %v1107 = vld [vmem:[#allocation12] sm:$0x1]
    %v1109 = vperm.slane %v1107, 0
    %vm1111 = vcmask 523264
    %v1113 = vsel %vm1111, %v1098, 0
    %1115 = vmatpush.msra.mxu0 0.0
    %1116 = vmatpush.msra.mxu0 0.0
    %1117 = vmatpush.msra.mxu0 0.0
    %1118 = vmatpush.msra.mxu0 0.0
    %1119 = vmatpush.msra.mxu0 0.0
    %1120 = vmatpush.msra.mxu0 0.0
    %1121 = vmatpush.msra.mxu0 0.0
    %1122 = vmatpush.msra.mxu0 0.0
    %1123 = vmatpush.msra.mxu0 %v1106
    %1124 = vmatpush.msra.mxu0 %v1105
    %1125 = vmatpush.msra.mxu0 %v1104
    %1126 = vmatpush.msra.mxu0 %v1103
    %1127 = vmatpush.msra.mxu0 %v1102
    %1128 = vmatpush.msra.mxu0 %v1101
    %1129 = vmatpush.msra.mxu0 %v1100
    %1130 = vmatpush.msra.mxu0 %v1099
    %1131 = vmatmul.f32.gmra.mxu0 %v1113
    %v1132 = vpop.f32.mrf.mxu0
    %v1133 = vadd.f32 %v1109, %v1132
    %1134 = vdwg.mxu0
    %v1135 = vld [vmem:[#allocation13] sm:$0xff]
    %v1136 = vld [vmem:[#allocation15] sm:$0xff]
    %v1137 = vld [vmem:[#allocation16] sm:$0xff]
    %v1138 = vxor.u32 %v1133, 2147483648
    %v1139 = vmul.f32 %v1138, 1.442695
    %v1140 = vpow.pop %v1139
    %v1141 = vadd.f32 %v1140, 1.0
    %v1142 = vrcp.pop %v1141
    %v1143 = vmul.f32 %v1141, %v1142
    %v1144 = vsub.f32 1.0, %v1143
    %v1145 = vmul.f32 %v1142, %v1144
    %v1146 = vadd.f32 %v1142, %v1145
    %vm1147 = vweird.f32 %v1141
    %vm1148 = vweird.f32 %v1142
    %vm1149 = vmor %vm1147, %vm1148
    %v1150 = vsel %vm1149, %v1142, %v1146
    %v1151 = vand.u32 2147483647, %v1141
    %vm1152 = vcmp.eq.f32.partialorder %v1151, 8.507059e+37
    %v1153 = vand.u32 %v1141, 2147483648
    %v1154 = vor.u32 1.1754944e-38, %v1153
    %v1155 = vsel %vm1152, %v1154, %v1150
    %v1156 = vmul.f32 1.0, %v1155
    %v1157 = vmul.f32 %v1156, 4.0
    %v1158 = vadd.f32 %v1157, %v1135
    %v1159 = vmul.f32 %v1133, 1.442695
    %v1160 = vpow.pop %v1159
    %v1161 = vmul.f32 %v1160, %v1136
    %vm1162 = vcmp.lt.f32.partialorder %v1137, 0.5
    %vm1163 = vcmp.lt.f32.partialorder %v1137, 1.5
    %v1164 = vsel %vm1163, %v1161, %v1156
    %v1165 = vsel %vm1162, %v1158, %v1164
    %vm1166 = vcmask 687104
    %1167 = vst.msk [vmem:[%s23] sm:$0xff] %vm1166, %v1165
    %v1168 = vld [vmem:[#allocation18] sm:$0xff]
    %v1169 = vld [vmem:[#allocation18 + $0x8] sm:$0xff]
    %vm1170 = vcmask 64512
    %v1172 = vsel %vm1170, %v1168, 0
    %v1175 = vsel %vm1170, %v1169, 0
    %1177 = vmatpush.msra.mxu0 0.0
    %1178 = vmatpush.msra.mxu0 0.0
    %1179 = vmatpush.msra.mxu0 0.0
    %1180 = vmatpush.msra.mxu0 0.0
    %1181 = vmatpush.msra.mxu0 0.0
    %1182 = vmatpush.msra.mxu0 0.0
    %1183 = vmatpush.msra.mxu0 0.0
    %1184 = vmatpush.msra.mxu0 0.0
    %1185 = vmatpush.msra.mxu0 0.0
    %1186 = vmatpush.msra.mxu0 0.0
    %1187 = vmatpush.msra.mxu0 0.0
    %1188 = vmatpush.msra.mxu0 0.0
    %1189 = vmatpush.msra.mxu0 0.0
    %1190 = vmatpush.msra.mxu0 0.0
    %1191 = vmatpush.msra.mxu0 0.0
    %1192 = vmatpush.msra.mxu0 %v1098
    %1193 = vmatmul.f32.gmra.mxu0 %v1172
    %v1194 = vpop.f32.mrf.mxu0
    %v1195 = vadd.f32 0.0, %v1194
    %1196 = vmatmul.f32.gmra.mxu0 %v1175
    %v1197 = vpop.f32.mrf.mxu0
    %v1198 = vadd.f32 0.0, %v1197
    %1199 = vdwg.mxu0
    %v1200 = vld [vmem:[#allocation19] sm:$0xff]
    %v1201 = vld [vmem:[#allocation19 + $0x8] sm:$0xff]
    %v1202 = vld [vmem:[#allocation19 + $0x10] sm:$0xff]
    %v1203 = vld [vmem:[#allocation19 + $0x18] sm:$0xff]
    %v1204 = vld [vmem:[#allocation19 + $0x20] sm:$0xff]
    %v1205 = vld [vmem:[#allocation19 + $0x28] sm:$0xff]
    %v1206 = vld [vmem:[#allocation19 + $0x30] sm:$0xff]
    %v1207 = vld [vmem:[#allocation19 + $0x38] sm:$0xff]
    %v1209 = vsel %vm1111, %v1195, 0
    %v1212 = vsel %vm1111, %v1198, 0
    %1214 = vmatpush.msra.mxu0 0.0
    %1215 = vmatpush.msra.mxu0 0.0
    %1216 = vmatpush.msra.mxu0 0.0
    %1217 = vmatpush.msra.mxu0 0.0
    %1218 = vmatpush.msra.mxu0 0.0
    %1219 = vmatpush.msra.mxu0 0.0
    %1220 = vmatpush.msra.mxu0 0.0
    %1221 = vmatpush.msra.mxu0 0.0
    %1222 = vmatpush.msra.mxu0 %v1207
    %1223 = vmatpush.msra.mxu0 %v1206
    %1224 = vmatpush.msra.mxu0 %v1205
    %1225 = vmatpush.msra.mxu0 %v1204
    %1226 = vmatpush.msra.mxu0 %v1203
    %1227 = vmatpush.msra.mxu0 %v1202
    %1228 = vmatpush.msra.mxu0 %v1201
    %1229 = vmatpush.msra.mxu0 %v1200
    %1230 = vmatmul.f32.gmra.mxu0 %v1209
    %v1231 = vpop.f32.mrf.mxu0
    %v1232 = vadd.f32 0.0, %v1231
    %1233 = vmatmul.f32.gmra.mxu0 %v1212
    %v1234 = vpop.f32.mrf.mxu0
    %v1235 = vadd.f32 0.0, %v1234
    %1236 = vdwg.mxu0
    %v1237 = vld [vmem:[%s18] sm:$0xff]
    %v1238 = vld [vmem:[%s18 + $0x8] sm:$0xff]
    %v1239 = vld [vmem:[%s18 + $0x10] sm:$0xff]
    %v1240 = vld [vmem:[%s18 + $0x18] sm:$0xff]
    %v1241 = vld [vmem:[%s18 + $0x20] sm:$0xff]
    %v1242 = vld [vmem:[%s18 + $0x28] sm:$0xff]
    %v1243 = vld [vmem:[%s18 + $0x30] sm:$0xff]
    %v1244 = vld [vmem:[%s18 + $0x38] sm:$0xff]
    %v1245 = vld [vmem:[%s18 + $0x40] sm:$0xff]
    %v1246 = vld [vmem:[%s18 + $0x48] sm:$0xff]
    %v1247 = vld [vmem:[%s18 + $0x50] sm:$0xff]
    %v1248 = vld [vmem:[%s18 + $0x58] sm:$0xff]
    %v1249 = vld [vmem:[%s18 + $0x60] sm:$0xff]
    %v1250 = vld [vmem:[%s18 + $0x68] sm:$0xff]
    %v1251 = vld [vmem:[%s18 + $0x70] sm:$0xff]
    %v1252 = vld [vmem:[%s18 + $0x78] sm:$0xff]
    %v1253 = vld [vmem:[%s18 + $0x80] sm:$0xff]
    %v1254 = vld [vmem:[%s18 + $0x88] sm:$0xff]
    %v1255 = vld [vmem:[%s18 + $0x90] sm:$0xff]
    %v1256 = vld [vmem:[%s18 + $0x98] sm:$0xff]
    %v1257 = vld [vmem:[%s18 + $0xa0] sm:$0xff]
    %v1258 = vld [vmem:[%s18 + $0xa8] sm:$0xff]
    %v1259 = vld [vmem:[%s18 + $0xb0] sm:$0xff]
    %v1260 = vld [vmem:[%s18 + $0xb8] sm:$0xff]
    %v1261 = vld [vmem:[%s18 + $0xc0] sm:$0xff]
    %v1262 = vld [vmem:[%s18 + $0xc8] sm:$0xff]
    %v1263 = vld [vmem:[%s18 + $0xd0] sm:$0xff]
    %v1264 = vld [vmem:[%s18 + $0xd8] sm:$0xff]
    %v1265 = vld [vmem:[%s18 + $0xe0] sm:$0xff]
    %v1266 = vld [vmem:[%s18 + $0xe8] sm:$0xff]
    %v1267 = vld [vmem:[%s18 + $0xf0] sm:$0xff]
    %v1268 = vld [vmem:[%s18 + $0xf8] sm:$0xff]
    %s1269 = scalar_lea.vmem %s18, 256
    %v1270 = vld [vmem:[%s1269] sm:$0xff]
    %v1271 = vld [vmem:[%s1269 + $0x8] sm:$0xff]
    %v1272 = vld [vmem:[%s1269 + $0x10] sm:$0xff]
    %v1273 = vld [vmem:[%s1269 + $0x18] sm:$0xff]
    %v1274 = vld [vmem:[%s1269 + $0x20] sm:$0xff]
    %v1275 = vld [vmem:[%s1269 + $0x28] sm:$0xff]
    %v1276 = vld [vmem:[%s1269 + $0x30] sm:$0xff]
    %v1277 = vld [vmem:[%s1269 + $0x38] sm:$0xff]
    %v1278 = vld [vmem:[%s1269 + $0x40] sm:$0xff]
    %v1279 = vld [vmem:[%s1269 + $0x48] sm:$0xff]
    %v1280 = vld [vmem:[%s1269 + $0x50] sm:$0xff]
    %v1281 = vld [vmem:[%s1269 + $0x58] sm:$0xff]
    %v1282 = vld [vmem:[%s1269 + $0x60] sm:$0xff]
    %v1283 = vld [vmem:[%s1269 + $0x68] sm:$0xff]
    %v1284 = vld [vmem:[%s1269 + $0x70] sm:$0xff]
    %v1285 = vld [vmem:[%s1269 + $0x78] sm:$0xff]
    %v1286 = vld [vmem:[%s1269 + $0x80] sm:$0xff]
    %v1287 = vld [vmem:[%s1269 + $0x88] sm:$0xff]
    %v1288 = vld [vmem:[%s1269 + $0x90] sm:$0xff]
    %v1289 = vld [vmem:[%s1269 + $0x98] sm:$0xff]
    %v1290 = vld [vmem:[%s1269 + $0xa0] sm:$0xff]
    %v1291 = vld [vmem:[%s1269 + $0xa8] sm:$0xff]
    %v1292 = vld [vmem:[%s1269 + $0xb0] sm:$0xff]
    %v1293 = vld [vmem:[%s1269 + $0xb8] sm:$0xff]
    %v1294 = vld [vmem:[%s1269 + $0xc0] sm:$0xff]
    %v1295 = vld [vmem:[%s1269 + $0xc8] sm:$0xff]
    %v1296 = vld [vmem:[%s1269 + $0xd0] sm:$0xff]
    %v1297 = vld [vmem:[%s1269 + $0xd8] sm:$0xff]
    %v1298 = vld [vmem:[%s1269 + $0xe0] sm:$0xff]
    %v1299 = vld [vmem:[%s1269 + $0xe8] sm:$0xff]
    %v1300 = vld [vmem:[%s1269 + $0xf0] sm:$0xff]
    %v1301 = vld [vmem:[%s1269 + $0xf8] sm:$0xff]
    %1302 = vmatpush.msra.mxu0 %v1300
    %1303 = vmatpush.msra.mxu0 %v1298
    %1304 = vmatpush.msra.mxu0 %v1296
    %1305 = vmatpush.msra.mxu0 %v1294
    %1306 = vmatpush.msra.mxu0 %v1292
    %1307 = vmatpush.msra.mxu0 %v1290
    %1308 = vmatpush.msra.mxu0 %v1288
    %1309 = vmatpush.msra.mxu0 %v1286
    %1310 = vmatpush.msra.mxu0 %v1284
    %1311 = vmatpush.msra.mxu0 %v1282
    %1312 = vmatpush.msra.mxu0 %v1280
    %1313 = vmatpush.msra.mxu0 %v1278
    %1314 = vmatpush.msra.mxu0 %v1276
    %1315 = vmatpush.msra.mxu0 %v1274
    %1316 = vmatpush.msra.mxu0 %v1272
    %1317 = vmatpush.msra.mxu0 %v1270
    %1318 = vmatmul.f32.gmra.mxu0 %v846
    %v1319 = vpop.f32.mrf.mxu0
    %v1320 = vadd.f32 0.0, %v1319
    %1321 = vmatmul.f32.gmra.mxu0 %v847
    %v1322 = vpop.f32.mrf.mxu0
    %v1323 = vadd.f32 0.0, %v1322
    %1324 = vdwg.mxu0
    %1325 = vmatpush.msra.mxu0 %v1301
    %1326 = vmatpush.msra.mxu0 %v1299
    %1327 = vmatpush.msra.mxu0 %v1297
    %1328 = vmatpush.msra.mxu0 %v1295
    %1329 = vmatpush.msra.mxu0 %v1293
    %1330 = vmatpush.msra.mxu0 %v1291
    %1331 = vmatpush.msra.mxu0 %v1289
    %1332 = vmatpush.msra.mxu0 %v1287
    %1333 = vmatpush.msra.mxu0 %v1285
    %1334 = vmatpush.msra.mxu0 %v1283
    %1335 = vmatpush.msra.mxu0 %v1281
    %1336 = vmatpush.msra.mxu0 %v1279
    %1337 = vmatpush.msra.mxu0 %v1277
    %1338 = vmatpush.msra.mxu0 %v1275
    %1339 = vmatpush.msra.mxu0 %v1273
    %1340 = vmatpush.msra.mxu0 %v1271
    %1341 = vmatmul.f32.gmra.mxu0 %v846
    %v1342 = vpop.f32.mrf.mxu0
    %v1343 = vadd.f32 0.0, %v1342
    %1344 = vmatmul.f32.gmra.mxu0 %v847
    %v1345 = vpop.f32.mrf.mxu0
    %v1346 = vadd.f32 0.0, %v1345
    %1347 = vdwg.mxu0
    %1348 = vmatpush.msra.mxu0 %v1267
    %1349 = vmatpush.msra.mxu0 %v1265
    %1350 = vmatpush.msra.mxu0 %v1263
    %1351 = vmatpush.msra.mxu0 %v1261
    %1352 = vmatpush.msra.mxu0 %v1259
    %1353 = vmatpush.msra.mxu0 %v1257
    %1354 = vmatpush.msra.mxu0 %v1255
    %1355 = vmatpush.msra.mxu0 %v1253
    %1356 = vmatpush.msra.mxu0 %v1251
    %1357 = vmatpush.msra.mxu0 %v1249
    %1358 = vmatpush.msra.mxu0 %v1247
    %1359 = vmatpush.msra.mxu0 %v1245
    %1360 = vmatpush.msra.mxu0 %v1243
    %1361 = vmatpush.msra.mxu0 %v1241
    %1362 = vmatpush.msra.mxu0 %v1239
    %1363 = vmatpush.msra.mxu0 %v1237
    %1364 = vmatmul.f32.gmra.mxu0 %v1232
    %v1365 = vpop.f32.mrf.mxu0
    %v1366 = vadd.f32 %v1320, %v1365
    %1367 = vmatmul.f32.gmra.mxu0 %v1235
    %v1368 = vpop.f32.mrf.mxu0
    %v1369 = vadd.f32 %v1323, %v1368
    %1370 = vdwg.mxu0
    %1371 = vmatpush.msra.mxu0 %v1268
    %1372 = vmatpush.msra.mxu0 %v1266
    %1373 = vmatpush.msra.mxu0 %v1264
    %1374 = vmatpush.msra.mxu0 %v1262
    %1375 = vmatpush.msra.mxu0 %v1260
    %1376 = vmatpush.msra.mxu0 %v1258
    %1377 = vmatpush.msra.mxu0 %v1256
    %1378 = vmatpush.msra.mxu0 %v1254
    %1379 = vmatpush.msra.mxu0 %v1252
    %1380 = vmatpush.msra.mxu0 %v1250
    %1381 = vmatpush.msra.mxu0 %v1248
    %1382 = vmatpush.msra.mxu0 %v1246
    %1383 = vmatpush.msra.mxu0 %v1244
    %1384 = vmatpush.msra.mxu0 %v1242
    %1385 = vmatpush.msra.mxu0 %v1240
    %1386 = vmatpush.msra.mxu0 %v1238
    %1387 = vmatmul.f32.gmra.mxu0 %v1232
    %v1388 = vpop.f32.mrf.mxu0
    %v1389 = vadd.f32 %v1343, %v1388
    %1390 = vmatmul.f32.gmra.mxu0 %v1235
    %v1391 = vpop.f32.mrf.mxu0
    %v1392 = vadd.f32 %v1346, %v1391
    %1393 = vdwg.mxu0
    %v1394 = vld [vmem:[#allocation21] sm:$0x3]
    %v1396 = vperm.slane %v1394, 0
    %v1397 = vperm.slane %v1394, 1
    %v1400 = vadd.f32 %v1366, %v1396
    %v1401 = vadd.f32 %v1389, %v1397
    %v1402 = vadd.f32 %v1369, %v1396
    %v1403 = vadd.f32 %v1392, %v1397
    %v1404 = vld [vmem:[%s20] sm:$0xff]
    %v1405 = vld [vmem:[%s20 + $0x8] sm:$0xff]
    %v1406 = vld [vmem:[%s20 + $0x10] sm:$0xff]
    %v1407 = vld [vmem:[%s20 + $0x18] sm:$0xff]
    %v1408 = vld [vmem:[#allocation22] sm:$0xff]
    %v1409 = vld [vmem:[#allocation22 + $0x8] sm:$0xff]
    %v1410 = vld [vmem:[#allocation22 + $0x10] sm:$0xff]
    %v1411 = vld [vmem:[#allocation22 + $0x18] sm:$0xff]
    %v1412 = vld [vmem:[#allocation24] sm:$0xff]
    %v1413 = vld [vmem:[#allocation24 + $0x8] sm:$0xff]
    %v1414 = vld [vmem:[#allocation24 + $0x10] sm:$0xff]
    %v1415 = vld [vmem:[#allocation24 + $0x18] sm:$0xff]
    %v1416 = vxor.u32 %v1400, 2147483648
    %v1417 = vxor.u32 %v1401, 2147483648
    %v1418 = vxor.u32 %v1402, 2147483648
    %v1419 = vxor.u32 %v1403, 2147483648
    %v1420 = vmul.f32 %v1416, 1.442695
    %v1421 = vpow.pop %v1420
    %v1422 = vmul.f32 %v1417, 1.442695
    %v1423 = vpow.pop %v1422
    %v1424 = vmul.f32 %v1418, 1.442695
    %v1425 = vpow.pop %v1424
    %v1426 = vmul.f32 %v1419, 1.442695
    %v1427 = vpow.pop %v1426
    %v1428 = vadd.f32 %v1421, 1.0
    %v1429 = vadd.f32 %v1423, 1.0
    %v1430 = vadd.f32 %v1425, 1.0
    %v1431 = vadd.f32 %v1427, 1.0
    %v1432 = vrcp.pop %v1428
    %v1433 = vmul.f32 %v1428, %v1432
    %v1434 = vsub.f32 1.0, %v1433
    %v1435 = vmul.f32 %v1432, %v1434
    %v1436 = vadd.f32 %v1432, %v1435
    %vm1437 = vweird.f32 %v1428
    %vm1438 = vweird.f32 %v1432
    %vm1439 = vmor %vm1437, %vm1438
    %v1440 = vsel %vm1439, %v1432, %v1436
    %v1441 = vand.u32 2147483647, %v1428
    %vm1442 = vcmp.eq.f32.partialorder %v1441, 8.507059e+37
    %v1443 = vand.u32 %v1428, 2147483648
    %v1444 = vor.u32 1.1754944e-38, %v1443
    %v1445 = vsel %vm1442, %v1444, %v1440
    %v1446 = vmul.f32 1.0, %v1445
    %v1447 = vrcp.pop %v1429
    %v1448 = vmul.f32 %v1429, %v1447
    %v1449 = vsub.f32 1.0, %v1448
    %v1450 = vmul.f32 %v1447, %v1449
    %v1451 = vadd.f32 %v1447, %v1450
    %vm1452 = vweird.f32 %v1429
    %vm1453 = vweird.f32 %v1447
    %vm1454 = vmor %vm1452, %vm1453
    %v1455 = vsel %vm1454, %v1447, %v1451
    %v1456 = vand.u32 2147483647, %v1429
    %vm1457 = vcmp.eq.f32.partialorder %v1456, 8.507059e+37
    %v1458 = vand.u32 %v1429, 2147483648
    %v1459 = vor.u32 1.1754944e-38, %v1458
    %v1460 = vsel %vm1457, %v1459, %v1455
    %v1461 = vmul.f32 1.0, %v1460
    %v1462 = vrcp.pop %v1430
    %v1463 = vmul.f32 %v1430, %v1462
    %v1464 = vsub.f32 1.0, %v1463
    %v1465 = vmul.f32 %v1462, %v1464
    %v1466 = vadd.f32 %v1462, %v1465
    %vm1467 = vweird.f32 %v1430
    %vm1468 = vweird.f32 %v1462
    %vm1469 = vmor %vm1467, %vm1468
    %v1470 = vsel %vm1469, %v1462, %v1466
    %v1471 = vand.u32 2147483647, %v1430
    %vm1472 = vcmp.eq.f32.partialorder %v1471, 8.507059e+37
    %v1473 = vand.u32 %v1430, 2147483648
    %v1474 = vor.u32 1.1754944e-38, %v1473
    %v1475 = vsel %vm1472, %v1474, %v1470
    %v1476 = vmul.f32 1.0, %v1475
    %v1477 = vrcp.pop %v1431
    %v1478 = vmul.f32 %v1431, %v1477
    %v1479 = vsub.f32 1.0, %v1478
    %v1480 = vmul.f32 %v1477, %v1479
    %v1481 = vadd.f32 %v1477, %v1480
    %vm1482 = vweird.f32 %v1431
    %vm1483 = vweird.f32 %v1477
    %vm1484 = vmor %vm1482, %vm1483
    %v1485 = vsel %vm1484, %v1477, %v1481
    %v1486 = vand.u32 2147483647, %v1431
    %vm1487 = vcmp.eq.f32.partialorder %v1486, 8.507059e+37
    %v1488 = vand.u32 %v1431, 2147483648
    %v1489 = vor.u32 1.1754944e-38, %v1488
    %v1490 = vsel %vm1487, %v1489, %v1485
    %v1491 = vmul.f32 1.0, %v1490
    %v1492 = vmul.f32 %v1446, 2.0
    %v1493 = vmul.f32 %v1461, 2.0
    %v1494 = vmul.f32 %v1476, 2.0
    %v1495 = vmul.f32 %v1491, 2.0
    %v1496 = vadd.f32 %v1492, %v1404
    %v1497 = vadd.f32 %v1493, %v1405
    %v1498 = vadd.f32 %v1494, %v1406
    %v1499 = vadd.f32 %v1495, %v1407
    %v1500 = vmul.f32 %v1400, 1.442695
    %v1501 = vpow.pop %v1500
    %v1502 = vmul.f32 %v1401, 1.442695
    %v1503 = vpow.pop %v1502
    %v1504 = vmul.f32 %v1402, 1.442695
    %v1505 = vpow.pop %v1504
    %v1506 = vmul.f32 %v1403, 1.442695
    %v1507 = vpow.pop %v1506
    %v1508 = vmul.f32 %v1501, %v1408
    %v1509 = vmul.f32 %v1503, %v1409
    %v1510 = vmul.f32 %v1505, %v1410
    %v1511 = vmul.f32 %v1507, %v1411
    %vm1512 = vcmp.lt.f32.partialorder %v1412, 0.5
    %vm1513 = vcmp.lt.f32.partialorder %v1413, 0.5
    %vm1514 = vcmp.lt.f32.partialorder %v1414, 0.5
    %vm1515 = vcmp.lt.f32.partialorder %v1415, 0.5
    %vm1516 = vcmp.lt.f32.partialorder %v1412, 1.5
    %vm1517 = vcmp.lt.f32.partialorder %v1413, 1.5
    %vm1518 = vcmp.lt.f32.partialorder %v1414, 1.5
    %vm1519 = vcmp.lt.f32.partialorder %v1415, 1.5
    %v1520 = vsel %vm1516, %v1508, %v1446
    %v1521 = vsel %vm1517, %v1509, %v1461
    %v1522 = vsel %vm1518, %v1510, %v1476
    %v1523 = vsel %vm1519, %v1511, %v1491
    %v1524 = vsel %vm1512, %v1496, %v1520
    %v1525 = vsel %vm1513, %v1497, %v1521
    %v1526 = vsel %vm1514, %v1498, %v1522
    %v1527 = vsel %vm1515, %v1499, %v1523
    %1528 = vst [vmem:[%s24] sm:$0xff] %v1524
    %vm1529 = vcmask 326656
    %1530 = vst.msk [vmem:[%s24 + $0x8] sm:$0xff] %vm1529, %v1525
    %1531 = vst [vmem:[%s24 + $0x10] sm:$0xff] %v1526
    %1532 = vst.msk [vmem:[%s24 + $0x18] sm:$0xff] %vm1529, %v1527
    // Predicated region
    $region154: #{forward.1} parent=1 // pred_check
      _
    $region155: #{forward.1} parent=1 // pred_check_branch
      %1534 = sbr.rel (0) target = $region157
    $region156: #{forward.1} parent=1 // pred_region
      _
    $region157: #{forward.1} parent=1 // pred_fallthru
      _
    // Predicated region
    $region158: #{forward.1} parent=1 // pred_check
      _
    $region159: #{forward.1} parent=1 // pred_check_branch
      %1536 = sbr.rel (0) target = $region161
    $region160: #{forward.1} parent=1 // pred_region
      _
    $region161: #{forward.1} parent=1 // pred_fallthru
      _
    // Predicated region
    $region162: #{forward.1} parent=1 // pred_check
      _
    $region163: #{forward.1} parent=1 // pred_check_branch
      %1538 = sbr.rel (0) target = $region165
    $region164: #{forward.1} parent=1 // pred_region
      _
    $region165: #{forward.1} parent=1 // pred_fallthru
      _
    // Predicated region
    $region166: #{forward.1} parent=1 // pred_check
      _
    $region167: #{forward.1} parent=1 // pred_check_branch
      %1540 = sbr.rel (0) target = $region169
    $region168: #{forward.1} parent=1 // pred_region
      _
    $region169: #{forward.1} parent=1 // pred_fallthru
      _
    %1541 = vsyncpa [#allocation3], 1
    %1542 = vsyncpa [#allocation5], 1
    %1543 = vsyncpa [#allocation8], 1
    %1544 = vsyncpa [#allocation11], 1
    %1545 = vsyncpa [#allocation14], 1
    %1546 = vsyncpa [#allocation17], 1
    %1547 = vsyncpa [#allocation20], 1
    %1548 = vsyncpa [#allocation23], 1

</llo_original>
